<compile_context>
chip_gen: v7x
topology: tpu7x:2x2x1
jax: 0.10.0
libtpu: 0.0.40
codegen_flags: <defaults>
</compile_context>

<pallas_src>
import functools

import jax
import jax.numpy as jnp
from jax.experimental import pallas as pl
from jax.experimental.pallas import tpu as pltpu

_EPS = 1e-5   # GroupNorm default eps
_K = 4        # depthwise conv kernel size


def _tfar_kernel(m_ref, n_ref, mmask_ref, nmask_ref,
                 w1_ref, p1_ref, w2_ref, p2_ref, w3_ref, p3_ref, g_ref,
                 out_ref, *, Wm, Wn):
    """One batch sample per grid step.

    Layout: sublane = channel (C), lane = flattened spatial H*W.
      m_ref     : (1, C, Hm*Wm)   tensor_m sample
      n_ref     : (1, C, Hn*Wn)   tensor_n sample
      mmask_ref : (16, Hm*Wm)     per-tap validity masks (emulate 'same' pad)
      nmask_ref : (16, Hn*Wn)
      w*_ref    : (C, 16)         depthwise conv weights, col = kh*4 + kw
      p*_ref    : (C, 3)          columns = [conv bias, GN gamma, GN beta]
      g_ref     : (Hn*Wn, Hm*Wm)  one-hot nearest-upsample gather matrix
      out_ref   : (1, C, Hm*Wm)
    """

    def conv_gn(x, masks, W, w, p, apply_sigmoid):
        C, HW = x.shape
        acc = jnp.zeros((C, HW), jnp.float32)
        for kh in range(_K):
            for kw in range(_K):
                t = kh * _K + kw
                d = (kh - 1) * W + (kw - 1)
                # shifted[i] = x[i + d]; taps that fall outside the image are
                # zeroed by the mask row (PyTorch padding='same' for k=4 pads
                # 1 before / 2 after with zeros).
                shifted = x if d == 0 else jnp.roll(x, -d, axis=1)
                acc = acc + (shifted * masks[t:t + 1, :]) * w[:, t:t + 1]
        acc = acc + p[:, 0:1]                               # conv bias
        # GroupNorm(num_groups=1): stats over the whole (C, H, W) sample,
        # computed in a single sweep (sum + sum of squares).
        inv_cnt = 1.0 / (C * HW)
        mean = jnp.sum(acc) * inv_cnt
        var = jnp.maximum(jnp.sum(acc * acc) * inv_cnt - mean * mean, 0.0)
        y = (acc - mean) * jax.lax.rsqrt(var + _EPS) * p[:, 1:2] + p[:, 2:3]
        if apply_sigmoid:
            # sigmoid = 1 / (1 + exp(-y)); exp and reciprocal both go to EUP.
            y = pl.reciprocal(1.0 + jnp.exp(-y), approx=True)
        return y

    m = m_ref[0]                   # (C, Hm*Wm)
    n = n_ref[0]                   # (C, Hn*Wn)
    mmask = mmask_ref[...]
    nmask = nmask_ref[...]

    w1n = conv_gn(n, nmask, Wn, w1_ref[...], p1_ref[...], True)
    w2m = conv_gn(m, mmask, Wm, w2_ref[...], p2_ref[...], False)
    w3n = conv_gn(n, nmask, Wn, w3_ref[...], p3_ref[...], False)

    # Nearest-neighbour upsample as a one-hot gather matmul on the MXU.
    g = g_ref[...]
    w1u = jnp.dot(w1n, g, preferred_element_type=jnp.float32)
    w3u = jnp.dot(w3n, g, preferred_element_type=jnp.float32)

    out_ref[0] = w1u * w2m + w3u


def _tap_masks(H, W):
    """0/1 mask per conv tap over the flattened H*W grid (zero-pad emulation)."""
    hh = jnp.repeat(jnp.arange(H), W)          # row index per flat position
    ww = jnp.tile(jnp.arange(W), H)            # col index per flat position
    rows = []
    for kh in range(_K):
        for kw in range(_K):
            dh, dw = kh - 1, kw - 1
            ok = ((hh + dh >= 0) & (hh + dh < H) &
                  (ww + dw >= 0) & (ww + dw < W))
            rows.append(ok)
    return jnp.stack(rows, axis=0).astype(jnp.float32)      # (16, H*W)


def _upsample_matrix(Hm, Wm, Hn, Wn):
    """One-hot (Hn*Wn, Hm*Wm) matrix for torch 'nearest': src = floor(dst*in/out)."""
    ri = (jnp.arange(Hm) * Hn) // Hm
    ci = (jnp.arange(Wm) * Wn) // Wm
    src = (ri[:, None] * Wn + ci[None, :]).reshape(-1)       # (Hm*Wm,)
    return (jnp.arange(Hn * Wn)[:, None] == src[None, :]).astype(jnp.float32)


def init_tfar_params(key, C):
    """Deterministic parameter init; shapes mirror the PyTorch module."""
    ks = jax.random.split(key, 6)
    params = {}
    for idx, name in enumerate(("w1", "w2", "w3")):
        kw_, kb_ = ks[2 * idx], ks[2 * idx + 1]
        # PyTorch depthwise Conv2d weight is (C, 1, 4, 4); flatten to (C, kh*4+kw).
        wt = jax.random.normal(kw_, (C, 1, _K, _K), jnp.float32) * 0.1
        conv_w = wt[:, 0].reshape(C, _K * _K)
        bias = jax.random.normal(kb_, (C,), jnp.float32) * 0.1
        gamma = jnp.ones((C,), jnp.float32)    # GroupNorm default affine init
        beta = jnp.zeros((C,), jnp.float32)
        params[name] = dict(conv_w=conv_w,
                            affine=jnp.stack([bias, gamma, beta], axis=1))
    return params


def tfar_forward(params, tensor_m, tensor_n):
    """tensor_m, tensor_n: NCHW (PyTorch convention).  Returns NCHW."""
    B, C, Hm, Wm = tensor_m.shape
    _, _, Hn, Wn = tensor_n.shape
    HWm, HWn = Hm * Wm, Hn * Wn

    # NCHW with flattened spatial is already the kernel layout -> reshape only.
    m = tensor_m.reshape(B, C, HWm).astype(jnp.float32)
    n = tensor_n.reshape(B, C, HWn).astype(jnp.float32)
    mmask = _tap_masks(Hm, Wm)
    nmask = _tap_masks(Hn, Wn)
    g = _upsample_matrix(Hm, Wm, Hn, Wn)

    p1, p2, p3 = params["w1"], params["w2"], params["w3"]
    kern = functools.partial(_tfar_kernel, Wm=Wm, Wn=Wn)
    const2 = lambda i: (0, 0)

    out = pl.pallas_call(
        kern,
        out_shape=jax.ShapeDtypeStruct((B, C, HWm), jnp.float32),
        grid=(B,),
        in_specs=[
            pl.BlockSpec((1, C, HWm), lambda i: (i, 0, 0)),
            pl.BlockSpec((1, C, HWn), lambda i: (i, 0, 0)),
            pl.BlockSpec((_K * _K, HWm), const2),
            pl.BlockSpec((_K * _K, HWn), const2),
            pl.BlockSpec((C, _K * _K), const2),
            pl.BlockSpec((C, 3), const2),
            pl.BlockSpec((C, _K * _K), const2),
            pl.BlockSpec((C, 3), const2),
            pl.BlockSpec((C, _K * _K), const2),
            pl.BlockSpec((C, 3), const2),
            pl.BlockSpec((HWn, HWm), const2),
        ],
        out_specs=pl.BlockSpec((1, C, HWm), lambda i: (i, 0, 0)),
        compiler_params=pltpu.CompilerParams(
            dimension_semantics=("parallel",)),
    )(m, n, mmask, nmask,
      p1["conv_w"], p1["affine"], p2["conv_w"], p2["affine"],
      p3["conv_w"], p3["affine"], g)

    return out.reshape(B, C, Hm, Wm)


if __name__ == "__main__":
    key = jax.random.PRNGKey(0)
    kp, km, kn = jax.random.split(key, 3)

    B, C = 2, 4            # input_size = 4 channels
    Hm, Wm = 16, 16        # tensor_m spatial size (target of the upsample)
    Hn, Wn = 8, 8          # tensor_n spatial size (gets upsampled)

    params = init_tfar_params(kp, C)
    tensor_m = jax.random.normal(km, (B, C, Hm, Wm), jnp.float32)
    tensor_n = jax.random.normal(kn, (B, C, Hn, Wn), jnp.float32)

    fwd = jax.jit(tfar_forward)
    out = jax.block_until_ready(fwd(params, tensor_m, tensor_n))
    assert out.shape == (B, C, Hm, Wm), out.shape
    assert out.dtype == jnp.float32
    print("KERNEL_OK")
</pallas_src>

<mosaic_0001>
module attributes {stable_mosaic.version = 11 : i64} {
  func.func @_tfar_kernel(%arg0: i32, %arg1: memref<1x4x256xf32, #tpu.memory_space<vmem>>, %arg2: memref<1x4x64xf32, #tpu.memory_space<vmem>>, %arg3: memref<16x256xf32, #tpu.memory_space<vmem>>, %arg4: memref<16x64xf32, #tpu.memory_space<vmem>>, %arg5: memref<4x16xf32, #tpu.memory_space<vmem>>, %arg6: memref<4x3xf32, #tpu.memory_space<vmem>>, %arg7: memref<4x16xf32, #tpu.memory_space<vmem>>, %arg8: memref<4x3xf32, #tpu.memory_space<vmem>>, %arg9: memref<4x16xf32, #tpu.memory_space<vmem>>, %arg10: memref<4x3xf32, #tpu.memory_space<vmem>>, %arg11: memref<64x256xf32, #tpu.memory_space<vmem>>, %arg12: memref<1x4x256xf32, #tpu.memory_space<vmem>>) attributes {dimension_semantics = [#tpu.dimension_semantics<parallel>], iteration_bounds = array<i64: 2>, scalar_prefetch = 0 : i64, scratch_operands = 0 : i64, tpu.core_type = #tpu.core_type<tc>, window_params = [{transform_indices = @transform_0, window_bounds = array<i64: 1, 4, 256>}, {transform_indices = @transform_1, window_bounds = array<i64: 1, 4, 64>}, {pipeline_mode = #tpu.pipeline_mode<synchronous>, transform_indices = @transform_2, window_bounds = array<i64: 16, 256>}, {pipeline_mode = #tpu.pipeline_mode<synchronous>, transform_indices = @transform_3, window_bounds = array<i64: 16, 64>}, {pipeline_mode = #tpu.pipeline_mode<synchronous>, transform_indices = @transform_4, window_bounds = array<i64: 4, 16>}, {pipeline_mode = #tpu.pipeline_mode<synchronous>, transform_indices = @transform_5, window_bounds = array<i64: 4, 3>}, {pipeline_mode = #tpu.pipeline_mode<synchronous>, transform_indices = @transform_6, window_bounds = array<i64: 4, 16>}, {pipeline_mode = #tpu.pipeline_mode<synchronous>, transform_indices = @transform_7, window_bounds = array<i64: 4, 3>}, {pipeline_mode = #tpu.pipeline_mode<synchronous>, transform_indices = @transform_8, window_bounds = array<i64: 4, 16>}, {pipeline_mode = #tpu.pipeline_mode<synchronous>, transform_indices = @transform_9, window_bounds = array<i64: 4, 3>}, {pipeline_mode = #tpu.pipeline_mode<synchronous>, transform_indices = @transform_10, window_bounds = array<i64: 64, 256>}, {transform_indices = @transform_11, window_bounds = array<i64: 1, 4, 256>}]} {
    %c0 = arith.constant 0 : index
    %c0_0 = arith.constant 0 : index
    %c0_1 = arith.constant 0 : index
    %0 = vector.load %arg1[%c0, %c0_0, %c0_1] : memref<1x4x256xf32, #tpu.memory_space<vmem>>, vector<1x4x256xf32>
    %1 = vector.shape_cast %0 : vector<1x4x256xf32> to vector<4x256xf32>
    %c0_2 = arith.constant 0 : index
    %c0_3 = arith.constant 0 : index
    %c0_4 = arith.constant 0 : index
    %2 = vector.load %arg2[%c0_2, %c0_3, %c0_4] : memref<1x4x64xf32, #tpu.memory_space<vmem>>, vector<1x4x64xf32>
    %3 = vector.shape_cast %2 : vector<1x4x64xf32> to vector<4x64xf32>
    %c0_5 = arith.constant 0 : index
    %c0_6 = arith.constant 0 : index
    %4 = vector.load %arg3[%c0_5, %c0_6] : memref<16x256xf32, #tpu.memory_space<vmem>>, vector<16x256xf32>
    %c0_7 = arith.constant 0 : index
    %c0_8 = arith.constant 0 : index
    %5 = vector.load %arg4[%c0_7, %c0_8] : memref<16x64xf32, #tpu.memory_space<vmem>>, vector<16x64xf32>
    %c0_9 = arith.constant 0 : index
    %c0_10 = arith.constant 0 : index
    %6 = vector.load %arg5[%c0_9, %c0_10] : memref<4x16xf32, #tpu.memory_space<vmem>>, vector<4x16xf32>
    %c0_11 = arith.constant 0 : index
    %c0_12 = arith.constant 0 : index
    %7 = vector.load %arg6[%c0_11, %c0_12] : memref<4x3xf32, #tpu.memory_space<vmem>>, vector<4x3xf32>
    %cst = arith.constant 0.000000e+00 : f32
    %8 = vector.broadcast %cst : f32 to vector<4x64xf32>
    %9 = vector.extract_strided_slice %3 {offsets = [0, 55], sizes = [4, 9], strides = [1, 1]} : vector<4x64xf32> to vector<4x9xf32>
    %10 = vector.extract_strided_slice %3 {offsets = [0, 0], sizes = [4, 55], strides = [1, 1]} : vector<4x64xf32> to vector<4x55xf32>
    %11 = tpu.concatenate %9, %10 in 1 : vector<4x9xf32>, vector<4x55xf32> -> vector<4x64xf32>
    %12 = vector.extract_strided_slice %5 {offsets = [0, 0], sizes = [1, 64], strides = [1, 1]} : vector<16x64xf32> to vector<1x64xf32>
    %13 = vector.broadcast %12 : vector<1x64xf32> to vector<4x64xf32>
    %14 = arith.mulf %11, %13 : vector<4x64xf32>
    %15 = vector.extract_strided_slice %6 {offsets = [0, 0], sizes = [4, 1], strides = [1, 1]} : vector<4x16xf32> to vector<4x1xf32>
    %16 = vector.broadcast %15 : vector<4x1xf32> to vector<4x64xf32>
    %17 = arith.mulf %14, %16 : vector<4x64xf32>
    %18 = arith.addf %8, %17 : vector<4x64xf32>
    %19 = vector.extract_strided_slice %3 {offsets = [0, 56], sizes = [4, 8], strides = [1, 1]} : vector<4x64xf32> to vector<4x8xf32>
    %20 = vector.extract_strided_slice %3 {offsets = [0, 0], sizes = [4, 56], strides = [1, 1]} : vector<4x64xf32> to vector<4x56xf32>
    %21 = tpu.concatenate %19, %20 in 1 : vector<4x8xf32>, vector<4x56xf32> -> vector<4x64xf32>
    %22 = vector.extract_strided_slice %5 {offsets = [1, 0], sizes = [1, 64], strides = [1, 1]} : vector<16x64xf32> to vector<1x64xf32>
    %23 = vector.broadcast %22 : vector<1x64xf32> to vector<4x64xf32>
    %24 = arith.mulf %21, %23 : vector<4x64xf32>
    %25 = vector.extract_strided_slice %6 {offsets = [0, 1], sizes = [4, 1], strides = [1, 1]} : vector<4x16xf32> to vector<4x1xf32>
    %26 = vector.broadcast %25 : vector<4x1xf32> to vector<4x64xf32>
    %27 = arith.mulf %24, %26 : vector<4x64xf32>
    %28 = arith.addf %18, %27 : vector<4x64xf32>
    %29 = vector.extract_strided_slice %3 {offsets = [0, 57], sizes = [4, 7], strides = [1, 1]} : vector<4x64xf32> to vector<4x7xf32>
    %30 = vector.extract_strided_slice %3 {offsets = [0, 0], sizes = [4, 57], strides = [1, 1]} : vector<4x64xf32> to vector<4x57xf32>
    %31 = tpu.concatenate %29, %30 in 1 : vector<4x7xf32>, vector<4x57xf32> -> vector<4x64xf32>
    %32 = vector.extract_strided_slice %5 {offsets = [2, 0], sizes = [1, 64], strides = [1, 1]} : vector<16x64xf32> to vector<1x64xf32>
    %33 = vector.broadcast %32 : vector<1x64xf32> to vector<4x64xf32>
    %34 = arith.mulf %31, %33 : vector<4x64xf32>
    %35 = vector.extract_strided_slice %6 {offsets = [0, 2], sizes = [4, 1], strides = [1, 1]} : vector<4x16xf32> to vector<4x1xf32>
    %36 = vector.broadcast %35 : vector<4x1xf32> to vector<4x64xf32>
    %37 = arith.mulf %34, %36 : vector<4x64xf32>
    %38 = arith.addf %28, %37 : vector<4x64xf32>
    %39 = vector.extract_strided_slice %3 {offsets = [0, 58], sizes = [4, 6], strides = [1, 1]} : vector<4x64xf32> to vector<4x6xf32>
    %40 = vector.extract_strided_slice %3 {offsets = [0, 0], sizes = [4, 58], strides = [1, 1]} : vector<4x64xf32> to vector<4x58xf32>
    %41 = tpu.concatenate %39, %40 in 1 : vector<4x6xf32>, vector<4x58xf32> -> vector<4x64xf32>
    %42 = vector.extract_strided_slice %5 {offsets = [3, 0], sizes = [1, 64], strides = [1, 1]} : vector<16x64xf32> to vector<1x64xf32>
    %43 = vector.broadcast %42 : vector<1x64xf32> to vector<4x64xf32>
    %44 = arith.mulf %41, %43 : vector<4x64xf32>
    %45 = vector.extract_strided_slice %6 {offsets = [0, 3], sizes = [4, 1], strides = [1, 1]} : vector<4x16xf32> to vector<4x1xf32>
    %46 = vector.broadcast %45 : vector<4x1xf32> to vector<4x64xf32>
    %47 = arith.mulf %44, %46 : vector<4x64xf32>
    %48 = arith.addf %38, %47 : vector<4x64xf32>
    %49 = vector.extract_strided_slice %3 {offsets = [0, 63], sizes = [4, 1], strides = [1, 1]} : vector<4x64xf32> to vector<4x1xf32>
    %50 = vector.extract_strided_slice %3 {offsets = [0, 0], sizes = [4, 63], strides = [1, 1]} : vector<4x64xf32> to vector<4x63xf32>
    %51 = tpu.concatenate %49, %50 in 1 : vector<4x1xf32>, vector<4x63xf32> -> vector<4x64xf32>
    %52 = vector.extract_strided_slice %5 {offsets = [4, 0], sizes = [1, 64], strides = [1, 1]} : vector<16x64xf32> to vector<1x64xf32>
    %53 = vector.broadcast %52 : vector<1x64xf32> to vector<4x64xf32>
    %54 = arith.mulf %51, %53 : vector<4x64xf32>
    %55 = vector.extract_strided_slice %6 {offsets = [0, 4], sizes = [4, 1], strides = [1, 1]} : vector<4x16xf32> to vector<4x1xf32>
    %56 = vector.broadcast %55 : vector<4x1xf32> to vector<4x64xf32>
    %57 = arith.mulf %54, %56 : vector<4x64xf32>
    %58 = arith.addf %48, %57 : vector<4x64xf32>
    %59 = vector.extract_strided_slice %5 {offsets = [5, 0], sizes = [1, 64], strides = [1, 1]} : vector<16x64xf32> to vector<1x64xf32>
    %60 = vector.broadcast %59 : vector<1x64xf32> to vector<4x64xf32>
    %61 = arith.mulf %3, %60 : vector<4x64xf32>
    %62 = vector.extract_strided_slice %6 {offsets = [0, 5], sizes = [4, 1], strides = [1, 1]} : vector<4x16xf32> to vector<4x1xf32>
    %63 = vector.broadcast %62 : vector<4x1xf32> to vector<4x64xf32>
    %64 = arith.mulf %61, %63 : vector<4x64xf32>
    %65 = arith.addf %58, %64 : vector<4x64xf32>
    %66 = vector.extract_strided_slice %3 {offsets = [0, 1], sizes = [4, 63], strides = [1, 1]} : vector<4x64xf32> to vector<4x63xf32>
    %67 = vector.extract_strided_slice %3 {offsets = [0, 0], sizes = [4, 1], strides = [1, 1]} : vector<4x64xf32> to vector<4x1xf32>
    %68 = tpu.concatenate %66, %67 in 1 : vector<4x63xf32>, vector<4x1xf32> -> vector<4x64xf32>
    %69 = vector.extract_strided_slice %5 {offsets = [6, 0], sizes = [1, 64], strides = [1, 1]} : vector<16x64xf32> to vector<1x64xf32>
    %70 = vector.broadcast %69 : vector<1x64xf32> to vector<4x64xf32>
    %71 = arith.mulf %68, %70 : vector<4x64xf32>
    %72 = vector.extract_strided_slice %6 {offsets = [0, 6], sizes = [4, 1], strides = [1, 1]} : vector<4x16xf32> to vector<4x1xf32>
    %73 = vector.broadcast %72 : vector<4x1xf32> to vector<4x64xf32>
    %74 = arith.mulf %71, %73 : vector<4x64xf32>
    %75 = arith.addf %65, %74 : vector<4x64xf32>
    %76 = vector.extract_strided_slice %3 {offsets = [0, 2], sizes = [4, 62], strides = [1, 1]} : vector<4x64xf32> to vector<4x62xf32>
    %77 = vector.extract_strided_slice %3 {offsets = [0, 0], sizes = [4, 2], strides = [1, 1]} : vector<4x64xf32> to vector<4x2xf32>
    %78 = tpu.concatenate %76, %77 in 1 : vector<4x62xf32>, vector<4x2xf32> -> vector<4x64xf32>
    %79 = vector.extract_strided_slice %5 {offsets = [7, 0], sizes = [1, 64], strides = [1, 1]} : vector<16x64xf32> to vector<1x64xf32>
    %80 = vector.broadcast %79 : vector<1x64xf32> to vector<4x64xf32>
    %81 = arith.mulf %78, %80 : vector<4x64xf32>
    %82 = vector.extract_strided_slice %6 {offsets = [0, 7], sizes = [4, 1], strides = [1, 1]} : vector<4x16xf32> to vector<4x1xf32>
    %83 = vector.broadcast %82 : vector<4x1xf32> to vector<4x64xf32>
    %84 = arith.mulf %81, %83 : vector<4x64xf32>
    %85 = arith.addf %75, %84 : vector<4x64xf32>
    %86 = vector.extract_strided_slice %3 {offsets = [0, 7], sizes = [4, 57], strides = [1, 1]} : vector<4x64xf32> to vector<4x57xf32>
    %87 = vector.extract_strided_slice %3 {offsets = [0, 0], sizes = [4, 7], strides = [1, 1]} : vector<4x64xf32> to vector<4x7xf32>
    %88 = tpu.concatenate %86, %87 in 1 : vector<4x57xf32>, vector<4x7xf32> -> vector<4x64xf32>
    %89 = vector.extract_strided_slice %5 {offsets = [8, 0], sizes = [1, 64], strides = [1, 1]} : vector<16x64xf32> to vector<1x64xf32>
    %90 = vector.broadcast %89 : vector<1x64xf32> to vector<4x64xf32>
    %91 = arith.mulf %88, %90 : vector<4x64xf32>
    %92 = vector.extract_strided_slice %6 {offsets = [0, 8], sizes = [4, 1], strides = [1, 1]} : vector<4x16xf32> to vector<4x1xf32>
    %93 = vector.broadcast %92 : vector<4x1xf32> to vector<4x64xf32>
    %94 = arith.mulf %91, %93 : vector<4x64xf32>
    %95 = arith.addf %85, %94 : vector<4x64xf32>
    %96 = vector.extract_strided_slice %3 {offsets = [0, 8], sizes = [4, 56], strides = [1, 1]} : vector<4x64xf32> to vector<4x56xf32>
    %97 = vector.extract_strided_slice %3 {offsets = [0, 0], sizes = [4, 8], strides = [1, 1]} : vector<4x64xf32> to vector<4x8xf32>
    %98 = tpu.concatenate %96, %97 in 1 : vector<4x56xf32>, vector<4x8xf32> -> vector<4x64xf32>
    %99 = vector.extract_strided_slice %5 {offsets = [9, 0], sizes = [1, 64], strides = [1, 1]} : vector<16x64xf32> to vector<1x64xf32>
    %100 = vector.broadcast %99 : vector<1x64xf32> to vector<4x64xf32>
    %101 = arith.mulf %98, %100 : vector<4x64xf32>
    %102 = vector.extract_strided_slice %6 {offsets = [0, 9], sizes = [4, 1], strides = [1, 1]} : vector<4x16xf32> to vector<4x1xf32>
    %103 = vector.broadcast %102 : vector<4x1xf32> to vector<4x64xf32>
    %104 = arith.mulf %101, %103 : vector<4x64xf32>
    %105 = arith.addf %95, %104 : vector<4x64xf32>
    %106 = vector.extract_strided_slice %3 {offsets = [0, 9], sizes = [4, 55], strides = [1, 1]} : vector<4x64xf32> to vector<4x55xf32>
    %107 = vector.extract_strided_slice %3 {offsets = [0, 0], sizes = [4, 9], strides = [1, 1]} : vector<4x64xf32> to vector<4x9xf32>
    %108 = tpu.concatenate %106, %107 in 1 : vector<4x55xf32>, vector<4x9xf32> -> vector<4x64xf32>
    %109 = vector.extract_strided_slice %5 {offsets = [10, 0], sizes = [1, 64], strides = [1, 1]} : vector<16x64xf32> to vector<1x64xf32>
    %110 = vector.broadcast %109 : vector<1x64xf32> to vector<4x64xf32>
    %111 = arith.mulf %108, %110 : vector<4x64xf32>
    %112 = vector.extract_strided_slice %6 {offsets = [0, 10], sizes = [4, 1], strides = [1, 1]} : vector<4x16xf32> to vector<4x1xf32>
    %113 = vector.broadcast %112 : vector<4x1xf32> to vector<4x64xf32>
    %114 = arith.mulf %111, %113 : vector<4x64xf32>
    %115 = arith.addf %105, %114 : vector<4x64xf32>
    %116 = vector.extract_strided_slice %3 {offsets = [0, 10], sizes = [4, 54], strides = [1, 1]} : vector<4x64xf32> to vector<4x54xf32>
    %117 = vector.extract_strided_slice %3 {offsets = [0, 0], sizes = [4, 10], strides = [1, 1]} : vector<4x64xf32> to vector<4x10xf32>
    %118 = tpu.concatenate %116, %117 in 1 : vector<4x54xf32>, vector<4x10xf32> -> vector<4x64xf32>
    %119 = vector.extract_strided_slice %5 {offsets = [11, 0], sizes = [1, 64], strides = [1, 1]} : vector<16x64xf32> to vector<1x64xf32>
    %120 = vector.broadcast %119 : vector<1x64xf32> to vector<4x64xf32>
    %121 = arith.mulf %118, %120 : vector<4x64xf32>
    %122 = vector.extract_strided_slice %6 {offsets = [0, 11], sizes = [4, 1], strides = [1, 1]} : vector<4x16xf32> to vector<4x1xf32>
    %123 = vector.broadcast %122 : vector<4x1xf32> to vector<4x64xf32>
    %124 = arith.mulf %121, %123 : vector<4x64xf32>
    %125 = arith.addf %115, %124 : vector<4x64xf32>
    %126 = vector.extract_strided_slice %3 {offsets = [0, 15], sizes = [4, 49], strides = [1, 1]} : vector<4x64xf32> to vector<4x49xf32>
    %127 = vector.extract_strided_slice %3 {offsets = [0, 0], sizes = [4, 15], strides = [1, 1]} : vector<4x64xf32> to vector<4x15xf32>
    %128 = tpu.concatenate %126, %127 in 1 : vector<4x49xf32>, vector<4x15xf32> -> vector<4x64xf32>
    %129 = vector.extract_strided_slice %5 {offsets = [12, 0], sizes = [1, 64], strides = [1, 1]} : vector<16x64xf32> to vector<1x64xf32>
    %130 = vector.broadcast %129 : vector<1x64xf32> to vector<4x64xf32>
    %131 = arith.mulf %128, %130 : vector<4x64xf32>
    %132 = vector.extract_strided_slice %6 {offsets = [0, 12], sizes = [4, 1], strides = [1, 1]} : vector<4x16xf32> to vector<4x1xf32>
    %133 = vector.broadcast %132 : vector<4x1xf32> to vector<4x64xf32>
    %134 = arith.mulf %131, %133 : vector<4x64xf32>
    %135 = arith.addf %125, %134 : vector<4x64xf32>
    %136 = vector.extract_strided_slice %3 {offsets = [0, 16], sizes = [4, 48], strides = [1, 1]} : vector<4x64xf32> to vector<4x48xf32>
    %137 = vector.extract_strided_slice %3 {offsets = [0, 0], sizes = [4, 16], strides = [1, 1]} : vector<4x64xf32> to vector<4x16xf32>
    %138 = tpu.concatenate %136, %137 in 1 : vector<4x48xf32>, vector<4x16xf32> -> vector<4x64xf32>
    %139 = vector.extract_strided_slice %5 {offsets = [13, 0], sizes = [1, 64], strides = [1, 1]} : vector<16x64xf32> to vector<1x64xf32>
    %140 = vector.broadcast %139 : vector<1x64xf32> to vector<4x64xf32>
    %141 = arith.mulf %138, %140 : vector<4x64xf32>
    %142 = vector.extract_strided_slice %6 {offsets = [0, 13], sizes = [4, 1], strides = [1, 1]} : vector<4x16xf32> to vector<4x1xf32>
    %143 = vector.broadcast %142 : vector<4x1xf32> to vector<4x64xf32>
    %144 = arith.mulf %141, %143 : vector<4x64xf32>
    %145 = arith.addf %135, %144 : vector<4x64xf32>
    %146 = vector.extract_strided_slice %3 {offsets = [0, 17], sizes = [4, 47], strides = [1, 1]} : vector<4x64xf32> to vector<4x47xf32>
    %147 = vector.extract_strided_slice %3 {offsets = [0, 0], sizes = [4, 17], strides = [1, 1]} : vector<4x64xf32> to vector<4x17xf32>
    %148 = tpu.concatenate %146, %147 in 1 : vector<4x47xf32>, vector<4x17xf32> -> vector<4x64xf32>
    %149 = vector.extract_strided_slice %5 {offsets = [14, 0], sizes = [1, 64], strides = [1, 1]} : vector<16x64xf32> to vector<1x64xf32>
    %150 = vector.broadcast %149 : vector<1x64xf32> to vector<4x64xf32>
    %151 = arith.mulf %148, %150 : vector<4x64xf32>
    %152 = vector.extract_strided_slice %6 {offsets = [0, 14], sizes = [4, 1], strides = [1, 1]} : vector<4x16xf32> to vector<4x1xf32>
    %153 = vector.broadcast %152 : vector<4x1xf32> to vector<4x64xf32>
    %154 = arith.mulf %151, %153 : vector<4x64xf32>
    %155 = arith.addf %145, %154 : vector<4x64xf32>
    %156 = vector.extract_strided_slice %3 {offsets = [0, 18], sizes = [4, 46], strides = [1, 1]} : vector<4x64xf32> to vector<4x46xf32>
    %157 = vector.extract_strided_slice %3 {offsets = [0, 0], sizes = [4, 18], strides = [1, 1]} : vector<4x64xf32> to vector<4x18xf32>
    %158 = tpu.concatenate %156, %157 in 1 : vector<4x46xf32>, vector<4x18xf32> -> vector<4x64xf32>
    %159 = vector.extract_strided_slice %5 {offsets = [15, 0], sizes = [1, 64], strides = [1, 1]} : vector<16x64xf32> to vector<1x64xf32>
    %160 = vector.broadcast %159 : vector<1x64xf32> to vector<4x64xf32>
    %161 = arith.mulf %158, %160 : vector<4x64xf32>
    %162 = vector.extract_strided_slice %6 {offsets = [0, 15], sizes = [4, 1], strides = [1, 1]} : vector<4x16xf32> to vector<4x1xf32>
    %163 = vector.broadcast %162 : vector<4x1xf32> to vector<4x64xf32>
    %164 = arith.mulf %161, %163 : vector<4x64xf32>
    %165 = arith.addf %155, %164 : vector<4x64xf32>
    %166 = vector.extract_strided_slice %7 {offsets = [0, 0], sizes = [4, 1], strides = [1, 1]} : vector<4x3xf32> to vector<4x1xf32>
    %167 = vector.broadcast %166 : vector<4x1xf32> to vector<4x64xf32>
    %168 = arith.addf %165, %167 : vector<4x64xf32>
    %169 = vector.shape_cast %168 : vector<4x64xf32> to vector<1x4x64xf32>
    %cst_13 = arith.constant dense<0.000000e+00> : vector<1xf32>
    %170 = vector.multi_reduction <add>, %169, %cst_13 [1, 2] : vector<1x4x64xf32> to vector<1xf32>
    %171 = vector.shape_cast %170 : vector<1xf32> to vector<1x1x1xf32>
    %172 = vector.extract %171[0, 0, 0] : f32 from vector<1x1x1xf32>
    %cst_14 = arith.constant 3.906250e-03 : f32
    %173 = arith.mulf %172, %cst_14 : f32
    %174 = arith.mulf %168, %168 : vector<4x64xf32>
    %175 = vector.shape_cast %174 : vector<4x64xf32> to vector<1x4x64xf32>
    %cst_15 = arith.constant dense<0.000000e+00> : vector<1xf32>
    %176 = vector.multi_reduction <add>, %175, %cst_15 [1, 2] : vector<1x4x64xf32> to vector<1xf32>
    %177 = vector.shape_cast %176 : vector<1xf32> to vector<1x1x1xf32>
    %178 = vector.extract %177[0, 0, 0] : f32 from vector<1x1x1xf32>
    %cst_16 = arith.constant 3.906250e-03 : f32
    %179 = arith.mulf %178, %cst_16 : f32
    %180 = arith.mulf %173, %173 : f32
    %181 = arith.subf %179, %180 : f32
    %cst_17 = arith.constant 0.000000e+00 : f32
    %182 = arith.maximumf %181, %cst_17 : f32
    %183 = vector.broadcast %173 : f32 to vector<4x64xf32>
    %184 = arith.subf %168, %183 : vector<4x64xf32>
    %cst_18 = arith.constant 9.99999974E-6 : f32
    %185 = arith.addf %182, %cst_18 : f32
    %186 = math.rsqrt %185 : f32
    %187 = vector.broadcast %186 : f32 to vector<4x64xf32>
    %188 = arith.mulf %184, %187 : vector<4x64xf32>
    %189 = vector.extract_strided_slice %7 {offsets = [0, 1], sizes = [4, 1], strides = [1, 1]} : vector<4x3xf32> to vector<4x1xf32>
    %190 = vector.broadcast %189 : vector<4x1xf32> to vector<4x64xf32>
    %191 = arith.mulf %188, %190 : vector<4x64xf32>
    %192 = vector.extract_strided_slice %7 {offsets = [0, 2], sizes = [4, 1], strides = [1, 1]} : vector<4x3xf32> to vector<4x1xf32>
    %193 = vector.broadcast %192 : vector<4x1xf32> to vector<4x64xf32>
    %194 = arith.addf %191, %193 : vector<4x64xf32>
    %cst_19 = arith.constant 0.000000e+00 : f32
    %195 = vector.broadcast %cst_19 : f32 to vector<4x64xf32>
    %196 = arith.subf %195, %194 : vector<4x64xf32>
    %197 = math.exp %196 : vector<4x64xf32>
    %cst_20 = arith.constant 1.000000e+00 : f32
    %198 = vector.broadcast %cst_20 : f32 to vector<4x64xf32>
    %199 = arith.addf %198, %197 : vector<4x64xf32>
    %200 = tpu.reciprocal %199 {approx = true} : vector<4x64xf32> -> vector<4x64xf32>
    %c0_21 = arith.constant 0 : index
    %c0_22 = arith.constant 0 : index
    %201 = vector.load %arg7[%c0_21, %c0_22] : memref<4x16xf32, #tpu.memory_space<vmem>>, vector<4x16xf32>
    %c0_23 = arith.constant 0 : index
    %c0_24 = arith.constant 0 : index
    %202 = vector.load %arg8[%c0_23, %c0_24] : memref<4x3xf32, #tpu.memory_space<vmem>>, vector<4x3xf32>
    %cst_25 = arith.constant 0.000000e+00 : f32
    %203 = vector.broadcast %cst_25 : f32 to vector<4x256xf32>
    %204 = vector.extract_strided_slice %1 {offsets = [0, 239], sizes = [4, 17], strides = [1, 1]} : vector<4x256xf32> to vector<4x17xf32>
    %205 = vector.extract_strided_slice %1 {offsets = [0, 0], sizes = [4, 239], strides = [1, 1]} : vector<4x256xf32> to vector<4x239xf32>
    %206 = tpu.concatenate %204, %205 in 1 : vector<4x17xf32>, vector<4x239xf32> -> vector<4x256xf32>
    %207 = vector.extract_strided_slice %4 {offsets = [0, 0], sizes = [1, 256], strides = [1, 1]} : vector<16x256xf32> to vector<1x256xf32>
    %208 = vector.broadcast %207 : vector<1x256xf32> to vector<4x256xf32>
    %209 = arith.mulf %206, %208 : vector<4x256xf32>
    %210 = vector.extract_strided_slice %201 {offsets = [0, 0], sizes = [4, 1], strides = [1, 1]} : vector<4x16xf32> to vector<4x1xf32>
    %211 = vector.broadcast %210 : vector<4x1xf32> to vector<4x256xf32>
    %212 = arith.mulf %209, %211 : vector<4x256xf32>
    %213 = arith.addf %203, %212 : vector<4x256xf32>
    %214 = vector.extract_strided_slice %1 {offsets = [0, 240], sizes = [4, 16], strides = [1, 1]} : vector<4x256xf32> to vector<4x16xf32>
    %215 = vector.extract_strided_slice %1 {offsets = [0, 0], sizes = [4, 240], strides = [1, 1]} : vector<4x256xf32> to vector<4x240xf32>
    %216 = tpu.concatenate %214, %215 in 1 : vector<4x16xf32>, vector<4x240xf32> -> vector<4x256xf32>
    %217 = vector.extract_strided_slice %4 {offsets = [1, 0], sizes = [1, 256], strides = [1, 1]} : vector<16x256xf32> to vector<1x256xf32>
    %218 = vector.broadcast %217 : vector<1x256xf32> to vector<4x256xf32>
    %219 = arith.mulf %216, %218 : vector<4x256xf32>
    %220 = vector.extract_strided_slice %201 {offsets = [0, 1], sizes = [4, 1], strides = [1, 1]} : vector<4x16xf32> to vector<4x1xf32>
    %221 = vector.broadcast %220 : vector<4x1xf32> to vector<4x256xf32>
    %222 = arith.mulf %219, %221 : vector<4x256xf32>
    %223 = arith.addf %213, %222 : vector<4x256xf32>
    %224 = vector.extract_strided_slice %1 {offsets = [0, 241], sizes = [4, 15], strides = [1, 1]} : vector<4x256xf32> to vector<4x15xf32>
    %225 = vector.extract_strided_slice %1 {offsets = [0, 0], sizes = [4, 241], strides = [1, 1]} : vector<4x256xf32> to vector<4x241xf32>
    %226 = tpu.concatenate %224, %225 in 1 : vector<4x15xf32>, vector<4x241xf32> -> vector<4x256xf32>
    %227 = vector.extract_strided_slice %4 {offsets = [2, 0], sizes = [1, 256], strides = [1, 1]} : vector<16x256xf32> to vector<1x256xf32>
    %228 = vector.broadcast %227 : vector<1x256xf32> to vector<4x256xf32>
    %229 = arith.mulf %226, %228 : vector<4x256xf32>
    %230 = vector.extract_strided_slice %201 {offsets = [0, 2], sizes = [4, 1], strides = [1, 1]} : vector<4x16xf32> to vector<4x1xf32>
    %231 = vector.broadcast %230 : vector<4x1xf32> to vector<4x256xf32>
    %232 = arith.mulf %229, %231 : vector<4x256xf32>
    %233 = arith.addf %223, %232 : vector<4x256xf32>
    %234 = vector.extract_strided_slice %1 {offsets = [0, 242], sizes = [4, 14], strides = [1, 1]} : vector<4x256xf32> to vector<4x14xf32>
    %235 = vector.extract_strided_slice %1 {offsets = [0, 0], sizes = [4, 242], strides = [1, 1]} : vector<4x256xf32> to vector<4x242xf32>
    %236 = tpu.concatenate %234, %235 in 1 : vector<4x14xf32>, vector<4x242xf32> -> vector<4x256xf32>
    %237 = vector.extract_strided_slice %4 {offsets = [3, 0], sizes = [1, 256], strides = [1, 1]} : vector<16x256xf32> to vector<1x256xf32>
    %238 = vector.broadcast %237 : vector<1x256xf32> to vector<4x256xf32>
    %239 = arith.mulf %236, %238 : vector<4x256xf32>
    %240 = vector.extract_strided_slice %201 {offsets = [0, 3], sizes = [4, 1], strides = [1, 1]} : vector<4x16xf32> to vector<4x1xf32>
    %241 = vector.broadcast %240 : vector<4x1xf32> to vector<4x256xf32>
    %242 = arith.mulf %239, %241 : vector<4x256xf32>
    %243 = arith.addf %233, %242 : vector<4x256xf32>
    %244 = vector.extract_strided_slice %1 {offsets = [0, 255], sizes = [4, 1], strides = [1, 1]} : vector<4x256xf32> to vector<4x1xf32>
    %245 = vector.extract_strided_slice %1 {offsets = [0, 0], sizes = [4, 255], strides = [1, 1]} : vector<4x256xf32> to vector<4x255xf32>
    %246 = tpu.concatenate %244, %245 in 1 : vector<4x1xf32>, vector<4x255xf32> -> vector<4x256xf32>
    %247 = vector.extract_strided_slice %4 {offsets = [4, 0], sizes = [1, 256], strides = [1, 1]} : vector<16x256xf32> to vector<1x256xf32>
    %248 = vector.broadcast %247 : vector<1x256xf32> to vector<4x256xf32>
    %249 = arith.mulf %246, %248 : vector<4x256xf32>
    %250 = vector.extract_strided_slice %201 {offsets = [0, 4], sizes = [4, 1], strides = [1, 1]} : vector<4x16xf32> to vector<4x1xf32>
    %251 = vector.broadcast %250 : vector<4x1xf32> to vector<4x256xf32>
    %252 = arith.mulf %249, %251 : vector<4x256xf32>
    %253 = arith.addf %243, %252 : vector<4x256xf32>
    %254 = vector.extract_strided_slice %4 {offsets = [5, 0], sizes = [1, 256], strides = [1, 1]} : vector<16x256xf32> to vector<1x256xf32>
    %255 = vector.broadcast %254 : vector<1x256xf32> to vector<4x256xf32>
    %256 = arith.mulf %1, %255 : vector<4x256xf32>
    %257 = vector.extract_strided_slice %201 {offsets = [0, 5], sizes = [4, 1], strides = [1, 1]} : vector<4x16xf32> to vector<4x1xf32>
    %258 = vector.broadcast %257 : vector<4x1xf32> to vector<4x256xf32>
    %259 = arith.mulf %256, %258 : vector<4x256xf32>
    %260 = arith.addf %253, %259 : vector<4x256xf32>
    %261 = vector.extract_strided_slice %1 {offsets = [0, 1], sizes = [4, 255], strides = [1, 1]} : vector<4x256xf32> to vector<4x255xf32>
    %262 = vector.extract_strided_slice %1 {offsets = [0, 0], sizes = [4, 1], strides = [1, 1]} : vector<4x256xf32> to vector<4x1xf32>
    %263 = tpu.concatenate %261, %262 in 1 : vector<4x255xf32>, vector<4x1xf32> -> vector<4x256xf32>
    %264 = vector.extract_strided_slice %4 {offsets = [6, 0], sizes = [1, 256], strides = [1, 1]} : vector<16x256xf32> to vector<1x256xf32>
    %265 = vector.broadcast %264 : vector<1x256xf32> to vector<4x256xf32>
    %266 = arith.mulf %263, %265 : vector<4x256xf32>
    %267 = vector.extract_strided_slice %201 {offsets = [0, 6], sizes = [4, 1], strides = [1, 1]} : vector<4x16xf32> to vector<4x1xf32>
    %268 = vector.broadcast %267 : vector<4x1xf32> to vector<4x256xf32>
    %269 = arith.mulf %266, %268 : vector<4x256xf32>
    %270 = arith.addf %260, %269 : vector<4x256xf32>
    %271 = vector.extract_strided_slice %1 {offsets = [0, 2], sizes = [4, 254], strides = [1, 1]} : vector<4x256xf32> to vector<4x254xf32>
    %272 = vector.extract_strided_slice %1 {offsets = [0, 0], sizes = [4, 2], strides = [1, 1]} : vector<4x256xf32> to vector<4x2xf32>
    %273 = tpu.concatenate %271, %272 in 1 : vector<4x254xf32>, vector<4x2xf32> -> vector<4x256xf32>
    %274 = vector.extract_strided_slice %4 {offsets = [7, 0], sizes = [1, 256], strides = [1, 1]} : vector<16x256xf32> to vector<1x256xf32>
    %275 = vector.broadcast %274 : vector<1x256xf32> to vector<4x256xf32>
    %276 = arith.mulf %273, %275 : vector<4x256xf32>
    %277 = vector.extract_strided_slice %201 {offsets = [0, 7], sizes = [4, 1], strides = [1, 1]} : vector<4x16xf32> to vector<4x1xf32>
    %278 = vector.broadcast %277 : vector<4x1xf32> to vector<4x256xf32>
    %279 = arith.mulf %276, %278 : vector<4x256xf32>
    %280 = arith.addf %270, %279 : vector<4x256xf32>
    %281 = vector.extract_strided_slice %1 {offsets = [0, 15], sizes = [4, 241], strides = [1, 1]} : vector<4x256xf32> to vector<4x241xf32>
    %282 = vector.extract_strided_slice %1 {offsets = [0, 0], sizes = [4, 15], strides = [1, 1]} : vector<4x256xf32> to vector<4x15xf32>
    %283 = tpu.concatenate %281, %282 in 1 : vector<4x241xf32>, vector<4x15xf32> -> vector<4x256xf32>
    %284 = vector.extract_strided_slice %4 {offsets = [8, 0], sizes = [1, 256], strides = [1, 1]} : vector<16x256xf32> to vector<1x256xf32>
    %285 = vector.broadcast %284 : vector<1x256xf32> to vector<4x256xf32>
    %286 = arith.mulf %283, %285 : vector<4x256xf32>
    %287 = vector.extract_strided_slice %201 {offsets = [0, 8], sizes = [4, 1], strides = [1, 1]} : vector<4x16xf32> to vector<4x1xf32>
    %288 = vector.broadcast %287 : vector<4x1xf32> to vector<4x256xf32>
    %289 = arith.mulf %286, %288 : vector<4x256xf32>
    %290 = arith.addf %280, %289 : vector<4x256xf32>
    %291 = vector.extract_strided_slice %1 {offsets = [0, 16], sizes = [4, 240], strides = [1, 1]} : vector<4x256xf32> to vector<4x240xf32>
    %292 = vector.extract_strided_slice %1 {offsets = [0, 0], sizes = [4, 16], strides = [1, 1]} : vector<4x256xf32> to vector<4x16xf32>
    %293 = tpu.concatenate %291, %292 in 1 : vector<4x240xf32>, vector<4x16xf32> -> vector<4x256xf32>
    %294 = vector.extract_strided_slice %4 {offsets = [9, 0], sizes = [1, 256], strides = [1, 1]} : vector<16x256xf32> to vector<1x256xf32>
    %295 = vector.broadcast %294 : vector<1x256xf32> to vector<4x256xf32>
    %296 = arith.mulf %293, %295 : vector<4x256xf32>
    %297 = vector.extract_strided_slice %201 {offsets = [0, 9], sizes = [4, 1], strides = [1, 1]} : vector<4x16xf32> to vector<4x1xf32>
    %298 = vector.broadcast %297 : vector<4x1xf32> to vector<4x256xf32>
    %299 = arith.mulf %296, %298 : vector<4x256xf32>
    %300 = arith.addf %290, %299 : vector<4x256xf32>
    %301 = vector.extract_strided_slice %1 {offsets = [0, 17], sizes = [4, 239], strides = [1, 1]} : vector<4x256xf32> to vector<4x239xf32>
    %302 = vector.extract_strided_slice %1 {offsets = [0, 0], sizes = [4, 17], strides = [1, 1]} : vector<4x256xf32> to vector<4x17xf32>
    %303 = tpu.concatenate %301, %302 in 1 : vector<4x239xf32>, vector<4x17xf32> -> vector<4x256xf32>
    %304 = vector.extract_strided_slice %4 {offsets = [10, 0], sizes = [1, 256], strides = [1, 1]} : vector<16x256xf32> to vector<1x256xf32>
    %305 = vector.broadcast %304 : vector<1x256xf32> to vector<4x256xf32>
    %306 = arith.mulf %303, %305 : vector<4x256xf32>
    %307 = vector.extract_strided_slice %201 {offsets = [0, 10], sizes = [4, 1], strides = [1, 1]} : vector<4x16xf32> to vector<4x1xf32>
    %308 = vector.broadcast %307 : vector<4x1xf32> to vector<4x256xf32>
    %309 = arith.mulf %306, %308 : vector<4x256xf32>
    %310 = arith.addf %300, %309 : vector<4x256xf32>
    %311 = vector.extract_strided_slice %1 {offsets = [0, 18], sizes = [4, 238], strides = [1, 1]} : vector<4x256xf32> to vector<4x238xf32>
    %312 = vector.extract_strided_slice %1 {offsets = [0, 0], sizes = [4, 18], strides = [1, 1]} : vector<4x256xf32> to vector<4x18xf32>
    %313 = tpu.concatenate %311, %312 in 1 : vector<4x238xf32>, vector<4x18xf32> -> vector<4x256xf32>
    %314 = vector.extract_strided_slice %4 {offsets = [11, 0], sizes = [1, 256], strides = [1, 1]} : vector<16x256xf32> to vector<1x256xf32>
    %315 = vector.broadcast %314 : vector<1x256xf32> to vector<4x256xf32>
    %316 = arith.mulf %313, %315 : vector<4x256xf32>
    %317 = vector.extract_strided_slice %201 {offsets = [0, 11], sizes = [4, 1], strides = [1, 1]} : vector<4x16xf32> to vector<4x1xf32>
    %318 = vector.broadcast %317 : vector<4x1xf32> to vector<4x256xf32>
    %319 = arith.mulf %316, %318 : vector<4x256xf32>
    %320 = arith.addf %310, %319 : vector<4x256xf32>
    %321 = vector.extract_strided_slice %1 {offsets = [0, 31], sizes = [4, 225], strides = [1, 1]} : vector<4x256xf32> to vector<4x225xf32>
    %322 = vector.extract_strided_slice %1 {offsets = [0, 0], sizes = [4, 31], strides = [1, 1]} : vector<4x256xf32> to vector<4x31xf32>
    %323 = tpu.concatenate %321, %322 in 1 : vector<4x225xf32>, vector<4x31xf32> -> vector<4x256xf32>
    %324 = vector.extract_strided_slice %4 {offsets = [12, 0], sizes = [1, 256], strides = [1, 1]} : vector<16x256xf32> to vector<1x256xf32>
    %325 = vector.broadcast %324 : vector<1x256xf32> to vector<4x256xf32>
    %326 = arith.mulf %323, %325 : vector<4x256xf32>
    %327 = vector.extract_strided_slice %201 {offsets = [0, 12], sizes = [4, 1], strides = [1, 1]} : vector<4x16xf32> to vector<4x1xf32>
    %328 = vector.broadcast %327 : vector<4x1xf32> to vector<4x256xf32>
    %329 = arith.mulf %326, %328 : vector<4x256xf32>
    %330 = arith.addf %320, %329 : vector<4x256xf32>
    %331 = vector.extract_strided_slice %1 {offsets = [0, 32], sizes = [4, 224], strides = [1, 1]} : vector<4x256xf32> to vector<4x224xf32>
    %332 = vector.extract_strided_slice %1 {offsets = [0, 0], sizes = [4, 32], strides = [1, 1]} : vector<4x256xf32> to vector<4x32xf32>
    %333 = tpu.concatenate %331, %332 in 1 : vector<4x224xf32>, vector<4x32xf32> -> vector<4x256xf32>
    %334 = vector.extract_strided_slice %4 {offsets = [13, 0], sizes = [1, 256], strides = [1, 1]} : vector<16x256xf32> to vector<1x256xf32>
    %335 = vector.broadcast %334 : vector<1x256xf32> to vector<4x256xf32>
    %336 = arith.mulf %333, %335 : vector<4x256xf32>
    %337 = vector.extract_strided_slice %201 {offsets = [0, 13], sizes = [4, 1], strides = [1, 1]} : vector<4x16xf32> to vector<4x1xf32>
    %338 = vector.broadcast %337 : vector<4x1xf32> to vector<4x256xf32>
    %339 = arith.mulf %336, %338 : vector<4x256xf32>
    %340 = arith.addf %330, %339 : vector<4x256xf32>
    %341 = vector.extract_strided_slice %1 {offsets = [0, 33], sizes = [4, 223], strides = [1, 1]} : vector<4x256xf32> to vector<4x223xf32>
    %342 = vector.extract_strided_slice %1 {offsets = [0, 0], sizes = [4, 33], strides = [1, 1]} : vector<4x256xf32> to vector<4x33xf32>
    %343 = tpu.concatenate %341, %342 in 1 : vector<4x223xf32>, vector<4x33xf32> -> vector<4x256xf32>
    %344 = vector.extract_strided_slice %4 {offsets = [14, 0], sizes = [1, 256], strides = [1, 1]} : vector<16x256xf32> to vector<1x256xf32>
    %345 = vector.broadcast %344 : vector<1x256xf32> to vector<4x256xf32>
    %346 = arith.mulf %343, %345 : vector<4x256xf32>
    %347 = vector.extract_strided_slice %201 {offsets = [0, 14], sizes = [4, 1], strides = [1, 1]} : vector<4x16xf32> to vector<4x1xf32>
    %348 = vector.broadcast %347 : vector<4x1xf32> to vector<4x256xf32>
    %349 = arith.mulf %346, %348 : vector<4x256xf32>
    %350 = arith.addf %340, %349 : vector<4x256xf32>
    %351 = vector.extract_strided_slice %1 {offsets = [0, 34], sizes = [4, 222], strides = [1, 1]} : vector<4x256xf32> to vector<4x222xf32>
    %352 = vector.extract_strided_slice %1 {offsets = [0, 0], sizes = [4, 34], strides = [1, 1]} : vector<4x256xf32> to vector<4x34xf32>
    %353 = tpu.concatenate %351, %352 in 1 : vector<4x222xf32>, vector<4x34xf32> -> vector<4x256xf32>
    %354 = vector.extract_strided_slice %4 {offsets = [15, 0], sizes = [1, 256], strides = [1, 1]} : vector<16x256xf32> to vector<1x256xf32>
    %355 = vector.broadcast %354 : vector<1x256xf32> to vector<4x256xf32>
    %356 = arith.mulf %353, %355 : vector<4x256xf32>
    %357 = vector.extract_strided_slice %201 {offsets = [0, 15], sizes = [4, 1], strides = [1, 1]} : vector<4x16xf32> to vector<4x1xf32>
    %358 = vector.broadcast %357 : vector<4x1xf32> to vector<4x256xf32>
    %359 = arith.mulf %356, %358 : vector<4x256xf32>
    %360 = arith.addf %350, %359 : vector<4x256xf32>
    %361 = vector.extract_strided_slice %202 {offsets = [0, 0], sizes = [4, 1], strides = [1, 1]} : vector<4x3xf32> to vector<4x1xf32>
    %362 = vector.broadcast %361 : vector<4x1xf32> to vector<4x256xf32>
    %363 = arith.addf %360, %362 : vector<4x256xf32>
    %364 = vector.shape_cast %363 : vector<4x256xf32> to vector<1x4x256xf32>
    %cst_26 = arith.constant dense<0.000000e+00> : vector<1xf32>
    %365 = vector.multi_reduction <add>, %364, %cst_26 [1, 2] : vector<1x4x256xf32> to vector<1xf32>
    %366 = vector.shape_cast %365 : vector<1xf32> to vector<1x1x1xf32>
    %367 = vector.extract %366[0, 0, 0] : f32 from vector<1x1x1xf32>
    %cst_27 = arith.constant 9.765625E-4 : f32
    %368 = arith.mulf %367, %cst_27 : f32
    %369 = arith.mulf %363, %363 : vector<4x256xf32>
    %370 = vector.shape_cast %369 : vector<4x256xf32> to vector<1x4x256xf32>
    %cst_28 = arith.constant dense<0.000000e+00> : vector<1xf32>
    %371 = vector.multi_reduction <add>, %370, %cst_28 [1, 2] : vector<1x4x256xf32> to vector<1xf32>
    %372 = vector.shape_cast %371 : vector<1xf32> to vector<1x1x1xf32>
    %373 = vector.extract %372[0, 0, 0] : f32 from vector<1x1x1xf32>
    %cst_29 = arith.constant 9.765625E-4 : f32
    %374 = arith.mulf %373, %cst_29 : f32
    %375 = arith.mulf %368, %368 : f32
    %376 = arith.subf %374, %375 : f32
    %cst_30 = arith.constant 0.000000e+00 : f32
    %377 = arith.maximumf %376, %cst_30 : f32
    %378 = vector.broadcast %368 : f32 to vector<4x256xf32>
    %379 = arith.subf %363, %378 : vector<4x256xf32>
    %cst_31 = arith.constant 9.99999974E-6 : f32
    %380 = arith.addf %377, %cst_31 : f32
    %381 = math.rsqrt %380 : f32
    %382 = vector.broadcast %381 : f32 to vector<4x256xf32>
    %383 = arith.mulf %379, %382 : vector<4x256xf32>
    %384 = vector.extract_strided_slice %202 {offsets = [0, 1], sizes = [4, 1], strides = [1, 1]} : vector<4x3xf32> to vector<4x1xf32>
    %385 = vector.broadcast %384 : vector<4x1xf32> to vector<4x256xf32>
    %386 = arith.mulf %383, %385 : vector<4x256xf32>
    %387 = vector.extract_strided_slice %202 {offsets = [0, 2], sizes = [4, 1], strides = [1, 1]} : vector<4x3xf32> to vector<4x1xf32>
    %388 = vector.broadcast %387 : vector<4x1xf32> to vector<4x256xf32>
    %389 = arith.addf %386, %388 : vector<4x256xf32>
    %c0_32 = arith.constant 0 : index
    %c0_33 = arith.constant 0 : index
    %390 = vector.load %arg9[%c0_32, %c0_33] : memref<4x16xf32, #tpu.memory_space<vmem>>, vector<4x16xf32>
    %c0_34 = arith.constant 0 : index
    %c0_35 = arith.constant 0 : index
    %391 = vector.load %arg10[%c0_34, %c0_35] : memref<4x3xf32, #tpu.memory_space<vmem>>, vector<4x3xf32>
    %cst_36 = arith.constant 0.000000e+00 : f32
    %392 = vector.broadcast %cst_36 : f32 to vector<4x64xf32>
    %393 = vector.extract_strided_slice %3 {offsets = [0, 55], sizes = [4, 9], strides = [1, 1]} : vector<4x64xf32> to vector<4x9xf32>
    %394 = vector.extract_strided_slice %3 {offsets = [0, 0], sizes = [4, 55], strides = [1, 1]} : vector<4x64xf32> to vector<4x55xf32>
    %395 = tpu.concatenate %393, %394 in 1 : vector<4x9xf32>, vector<4x55xf32> -> vector<4x64xf32>
    %396 = vector.extract_strided_slice %5 {offsets = [0, 0], sizes = [1, 64], strides = [1, 1]} : vector<16x64xf32> to vector<1x64xf32>
    %397 = vector.broadcast %396 : vector<1x64xf32> to vector<4x64xf32>
    %398 = arith.mulf %395, %397 : vector<4x64xf32>
    %399 = vector.extract_strided_slice %390 {offsets = [0, 0], sizes = [4, 1], strides = [1, 1]} : vector<4x16xf32> to vector<4x1xf32>
    %400 = vector.broadcast %399 : vector<4x1xf32> to vector<4x64xf32>
    %401 = arith.mulf %398, %400 : vector<4x64xf32>
    %402 = arith.addf %392, %401 : vector<4x64xf32>
    %403 = vector.extract_strided_slice %3 {offsets = [0, 56], sizes = [4, 8], strides = [1, 1]} : vector<4x64xf32> to vector<4x8xf32>
    %404 = vector.extract_strided_slice %3 {offsets = [0, 0], sizes = [4, 56], strides = [1, 1]} : vector<4x64xf32> to vector<4x56xf32>
    %405 = tpu.concatenate %403, %404 in 1 : vector<4x8xf32>, vector<4x56xf32> -> vector<4x64xf32>
    %406 = vector.extract_strided_slice %5 {offsets = [1, 0], sizes = [1, 64], strides = [1, 1]} : vector<16x64xf32> to vector<1x64xf32>
    %407 = vector.broadcast %406 : vector<1x64xf32> to vector<4x64xf32>
    %408 = arith.mulf %405, %407 : vector<4x64xf32>
    %409 = vector.extract_strided_slice %390 {offsets = [0, 1], sizes = [4, 1], strides = [1, 1]} : vector<4x16xf32> to vector<4x1xf32>
    %410 = vector.broadcast %409 : vector<4x1xf32> to vector<4x64xf32>
    %411 = arith.mulf %408, %410 : vector<4x64xf32>
    %412 = arith.addf %402, %411 : vector<4x64xf32>
    %413 = vector.extract_strided_slice %3 {offsets = [0, 57], sizes = [4, 7], strides = [1, 1]} : vector<4x64xf32> to vector<4x7xf32>
    %414 = vector.extract_strided_slice %3 {offsets = [0, 0], sizes = [4, 57], strides = [1, 1]} : vector<4x64xf32> to vector<4x57xf32>
    %415 = tpu.concatenate %413, %414 in 1 : vector<4x7xf32>, vector<4x57xf32> -> vector<4x64xf32>
    %416 = vector.extract_strided_slice %5 {offsets = [2, 0], sizes = [1, 64], strides = [1, 1]} : vector<16x64xf32> to vector<1x64xf32>
    %417 = vector.broadcast %416 : vector<1x64xf32> to vector<4x64xf32>
    %418 = arith.mulf %415, %417 : vector<4x64xf32>
    %419 = vector.extract_strided_slice %390 {offsets = [0, 2], sizes = [4, 1], strides = [1, 1]} : vector<4x16xf32> to vector<4x1xf32>
    %420 = vector.broadcast %419 : vector<4x1xf32> to vector<4x64xf32>
    %421 = arith.mulf %418, %420 : vector<4x64xf32>
    %422 = arith.addf %412, %421 : vector<4x64xf32>
    %423 = vector.extract_strided_slice %3 {offsets = [0, 58], sizes = [4, 6], strides = [1, 1]} : vector<4x64xf32> to vector<4x6xf32>
    %424 = vector.extract_strided_slice %3 {offsets = [0, 0], sizes = [4, 58], strides = [1, 1]} : vector<4x64xf32> to vector<4x58xf32>
    %425 = tpu.concatenate %423, %424 in 1 : vector<4x6xf32>, vector<4x58xf32> -> vector<4x64xf32>
    %426 = vector.extract_strided_slice %5 {offsets = [3, 0], sizes = [1, 64], strides = [1, 1]} : vector<16x64xf32> to vector<1x64xf32>
    %427 = vector.broadcast %426 : vector<1x64xf32> to vector<4x64xf32>
    %428 = arith.mulf %425, %427 : vector<4x64xf32>
    %429 = vector.extract_strided_slice %390 {offsets = [0, 3], sizes = [4, 1], strides = [1, 1]} : vector<4x16xf32> to vector<4x1xf32>
    %430 = vector.broadcast %429 : vector<4x1xf32> to vector<4x64xf32>
    %431 = arith.mulf %428, %430 : vector<4x64xf32>
    %432 = arith.addf %422, %431 : vector<4x64xf32>
    %433 = vector.extract_strided_slice %3 {offsets = [0, 63], sizes = [4, 1], strides = [1, 1]} : vector<4x64xf32> to vector<4x1xf32>
    %434 = vector.extract_strided_slice %3 {offsets = [0, 0], sizes = [4, 63], strides = [1, 1]} : vector<4x64xf32> to vector<4x63xf32>
    %435 = tpu.concatenate %433, %434 in 1 : vector<4x1xf32>, vector<4x63xf32> -> vector<4x64xf32>
    %436 = vector.extract_strided_slice %5 {offsets = [4, 0], sizes = [1, 64], strides = [1, 1]} : vector<16x64xf32> to vector<1x64xf32>
    %437 = vector.broadcast %436 : vector<1x64xf32> to vector<4x64xf32>
    %438 = arith.mulf %435, %437 : vector<4x64xf32>
    %439 = vector.extract_strided_slice %390 {offsets = [0, 4], sizes = [4, 1], strides = [1, 1]} : vector<4x16xf32> to vector<4x1xf32>
    %440 = vector.broadcast %439 : vector<4x1xf32> to vector<4x64xf32>
    %441 = arith.mulf %438, %440 : vector<4x64xf32>
    %442 = arith.addf %432, %441 : vector<4x64xf32>
    %443 = vector.extract_strided_slice %5 {offsets = [5, 0], sizes = [1, 64], strides = [1, 1]} : vector<16x64xf32> to vector<1x64xf32>
    %444 = vector.broadcast %443 : vector<1x64xf32> to vector<4x64xf32>
    %445 = arith.mulf %3, %444 : vector<4x64xf32>
    %446 = vector.extract_strided_slice %390 {offsets = [0, 5], sizes = [4, 1], strides = [1, 1]} : vector<4x16xf32> to vector<4x1xf32>
    %447 = vector.broadcast %446 : vector<4x1xf32> to vector<4x64xf32>
    %448 = arith.mulf %445, %447 : vector<4x64xf32>
    %449 = arith.addf %442, %448 : vector<4x64xf32>
    %450 = vector.extract_strided_slice %3 {offsets = [0, 1], sizes = [4, 63], strides = [1, 1]} : vector<4x64xf32> to vector<4x63xf32>
    %451 = vector.extract_strided_slice %3 {offsets = [0, 0], sizes = [4, 1], strides = [1, 1]} : vector<4x64xf32> to vector<4x1xf32>
    %452 = tpu.concatenate %450, %451 in 1 : vector<4x63xf32>, vector<4x1xf32> -> vector<4x64xf32>
    %453 = vector.extract_strided_slice %5 {offsets = [6, 0], sizes = [1, 64], strides = [1, 1]} : vector<16x64xf32> to vector<1x64xf32>
    %454 = vector.broadcast %453 : vector<1x64xf32> to vector<4x64xf32>
    %455 = arith.mulf %452, %454 : vector<4x64xf32>
    %456 = vector.extract_strided_slice %390 {offsets = [0, 6], sizes = [4, 1], strides = [1, 1]} : vector<4x16xf32> to vector<4x1xf32>
    %457 = vector.broadcast %456 : vector<4x1xf32> to vector<4x64xf32>
    %458 = arith.mulf %455, %457 : vector<4x64xf32>
    %459 = arith.addf %449, %458 : vector<4x64xf32>
    %460 = vector.extract_strided_slice %3 {offsets = [0, 2], sizes = [4, 62], strides = [1, 1]} : vector<4x64xf32> to vector<4x62xf32>
    %461 = vector.extract_strided_slice %3 {offsets = [0, 0], sizes = [4, 2], strides = [1, 1]} : vector<4x64xf32> to vector<4x2xf32>
    %462 = tpu.concatenate %460, %461 in 1 : vector<4x62xf32>, vector<4x2xf32> -> vector<4x64xf32>
    %463 = vector.extract_strided_slice %5 {offsets = [7, 0], sizes = [1, 64], strides = [1, 1]} : vector<16x64xf32> to vector<1x64xf32>
    %464 = vector.broadcast %463 : vector<1x64xf32> to vector<4x64xf32>
    %465 = arith.mulf %462, %464 : vector<4x64xf32>
    %466 = vector.extract_strided_slice %390 {offsets = [0, 7], sizes = [4, 1], strides = [1, 1]} : vector<4x16xf32> to vector<4x1xf32>
    %467 = vector.broadcast %466 : vector<4x1xf32> to vector<4x64xf32>
    %468 = arith.mulf %465, %467 : vector<4x64xf32>
    %469 = arith.addf %459, %468 : vector<4x64xf32>
    %470 = vector.extract_strided_slice %3 {offsets = [0, 7], sizes = [4, 57], strides = [1, 1]} : vector<4x64xf32> to vector<4x57xf32>
    %471 = vector.extract_strided_slice %3 {offsets = [0, 0], sizes = [4, 7], strides = [1, 1]} : vector<4x64xf32> to vector<4x7xf32>
    %472 = tpu.concatenate %470, %471 in 1 : vector<4x57xf32>, vector<4x7xf32> -> vector<4x64xf32>
    %473 = vector.extract_strided_slice %5 {offsets = [8, 0], sizes = [1, 64], strides = [1, 1]} : vector<16x64xf32> to vector<1x64xf32>
    %474 = vector.broadcast %473 : vector<1x64xf32> to vector<4x64xf32>
    %475 = arith.mulf %472, %474 : vector<4x64xf32>
    %476 = vector.extract_strided_slice %390 {offsets = [0, 8], sizes = [4, 1], strides = [1, 1]} : vector<4x16xf32> to vector<4x1xf32>
    %477 = vector.broadcast %476 : vector<4x1xf32> to vector<4x64xf32>
    %478 = arith.mulf %475, %477 : vector<4x64xf32>
    %479 = arith.addf %469, %478 : vector<4x64xf32>
    %480 = vector.extract_strided_slice %3 {offsets = [0, 8], sizes = [4, 56], strides = [1, 1]} : vector<4x64xf32> to vector<4x56xf32>
    %481 = vector.extract_strided_slice %3 {offsets = [0, 0], sizes = [4, 8], strides = [1, 1]} : vector<4x64xf32> to vector<4x8xf32>
    %482 = tpu.concatenate %480, %481 in 1 : vector<4x56xf32>, vector<4x8xf32> -> vector<4x64xf32>
    %483 = vector.extract_strided_slice %5 {offsets = [9, 0], sizes = [1, 64], strides = [1, 1]} : vector<16x64xf32> to vector<1x64xf32>
    %484 = vector.broadcast %483 : vector<1x64xf32> to vector<4x64xf32>
    %485 = arith.mulf %482, %484 : vector<4x64xf32>
    %486 = vector.extract_strided_slice %390 {offsets = [0, 9], sizes = [4, 1], strides = [1, 1]} : vector<4x16xf32> to vector<4x1xf32>
    %487 = vector.broadcast %486 : vector<4x1xf32> to vector<4x64xf32>
    %488 = arith.mulf %485, %487 : vector<4x64xf32>
    %489 = arith.addf %479, %488 : vector<4x64xf32>
    %490 = vector.extract_strided_slice %3 {offsets = [0, 9], sizes = [4, 55], strides = [1, 1]} : vector<4x64xf32> to vector<4x55xf32>
    %491 = vector.extract_strided_slice %3 {offsets = [0, 0], sizes = [4, 9], strides = [1, 1]} : vector<4x64xf32> to vector<4x9xf32>
    %492 = tpu.concatenate %490, %491 in 1 : vector<4x55xf32>, vector<4x9xf32> -> vector<4x64xf32>
    %493 = vector.extract_strided_slice %5 {offsets = [10, 0], sizes = [1, 64], strides = [1, 1]} : vector<16x64xf32> to vector<1x64xf32>
    %494 = vector.broadcast %493 : vector<1x64xf32> to vector<4x64xf32>
    %495 = arith.mulf %492, %494 : vector<4x64xf32>
    %496 = vector.extract_strided_slice %390 {offsets = [0, 10], sizes = [4, 1], strides = [1, 1]} : vector<4x16xf32> to vector<4x1xf32>
    %497 = vector.broadcast %496 : vector<4x1xf32> to vector<4x64xf32>
    %498 = arith.mulf %495, %497 : vector<4x64xf32>
    %499 = arith.addf %489, %498 : vector<4x64xf32>
    %500 = vector.extract_strided_slice %3 {offsets = [0, 10], sizes = [4, 54], strides = [1, 1]} : vector<4x64xf32> to vector<4x54xf32>
    %501 = vector.extract_strided_slice %3 {offsets = [0, 0], sizes = [4, 10], strides = [1, 1]} : vector<4x64xf32> to vector<4x10xf32>
    %502 = tpu.concatenate %500, %501 in 1 : vector<4x54xf32>, vector<4x10xf32> -> vector<4x64xf32>
    %503 = vector.extract_strided_slice %5 {offsets = [11, 0], sizes = [1, 64], strides = [1, 1]} : vector<16x64xf32> to vector<1x64xf32>
    %504 = vector.broadcast %503 : vector<1x64xf32> to vector<4x64xf32>
    %505 = arith.mulf %502, %504 : vector<4x64xf32>
    %506 = vector.extract_strided_slice %390 {offsets = [0, 11], sizes = [4, 1], strides = [1, 1]} : vector<4x16xf32> to vector<4x1xf32>
    %507 = vector.broadcast %506 : vector<4x1xf32> to vector<4x64xf32>
    %508 = arith.mulf %505, %507 : vector<4x64xf32>
    %509 = arith.addf %499, %508 : vector<4x64xf32>
    %510 = vector.extract_strided_slice %3 {offsets = [0, 15], sizes = [4, 49], strides = [1, 1]} : vector<4x64xf32> to vector<4x49xf32>
    %511 = vector.extract_strided_slice %3 {offsets = [0, 0], sizes = [4, 15], strides = [1, 1]} : vector<4x64xf32> to vector<4x15xf32>
    %512 = tpu.concatenate %510, %511 in 1 : vector<4x49xf32>, vector<4x15xf32> -> vector<4x64xf32>
    %513 = vector.extract_strided_slice %5 {offsets = [12, 0], sizes = [1, 64], strides = [1, 1]} : vector<16x64xf32> to vector<1x64xf32>
    %514 = vector.broadcast %513 : vector<1x64xf32> to vector<4x64xf32>
    %515 = arith.mulf %512, %514 : vector<4x64xf32>
    %516 = vector.extract_strided_slice %390 {offsets = [0, 12], sizes = [4, 1], strides = [1, 1]} : vector<4x16xf32> to vector<4x1xf32>
    %517 = vector.broadcast %516 : vector<4x1xf32> to vector<4x64xf32>
    %518 = arith.mulf %515, %517 : vector<4x64xf32>
    %519 = arith.addf %509, %518 : vector<4x64xf32>
    %520 = vector.extract_strided_slice %3 {offsets = [0, 16], sizes = [4, 48], strides = [1, 1]} : vector<4x64xf32> to vector<4x48xf32>
    %521 = vector.extract_strided_slice %3 {offsets = [0, 0], sizes = [4, 16], strides = [1, 1]} : vector<4x64xf32> to vector<4x16xf32>
    %522 = tpu.concatenate %520, %521 in 1 : vector<4x48xf32>, vector<4x16xf32> -> vector<4x64xf32>
    %523 = vector.extract_strided_slice %5 {offsets = [13, 0], sizes = [1, 64], strides = [1, 1]} : vector<16x64xf32> to vector<1x64xf32>
    %524 = vector.broadcast %523 : vector<1x64xf32> to vector<4x64xf32>
    %525 = arith.mulf %522, %524 : vector<4x64xf32>
    %526 = vector.extract_strided_slice %390 {offsets = [0, 13], sizes = [4, 1], strides = [1, 1]} : vector<4x16xf32> to vector<4x1xf32>
    %527 = vector.broadcast %526 : vector<4x1xf32> to vector<4x64xf32>
    %528 = arith.mulf %525, %527 : vector<4x64xf32>
    %529 = arith.addf %519, %528 : vector<4x64xf32>
    %530 = vector.extract_strided_slice %3 {offsets = [0, 17], sizes = [4, 47], strides = [1, 1]} : vector<4x64xf32> to vector<4x47xf32>
    %531 = vector.extract_strided_slice %3 {offsets = [0, 0], sizes = [4, 17], strides = [1, 1]} : vector<4x64xf32> to vector<4x17xf32>
    %532 = tpu.concatenate %530, %531 in 1 : vector<4x47xf32>, vector<4x17xf32> -> vector<4x64xf32>
    %533 = vector.extract_strided_slice %5 {offsets = [14, 0], sizes = [1, 64], strides = [1, 1]} : vector<16x64xf32> to vector<1x64xf32>
    %534 = vector.broadcast %533 : vector<1x64xf32> to vector<4x64xf32>
    %535 = arith.mulf %532, %534 : vector<4x64xf32>
    %536 = vector.extract_strided_slice %390 {offsets = [0, 14], sizes = [4, 1], strides = [1, 1]} : vector<4x16xf32> to vector<4x1xf32>
    %537 = vector.broadcast %536 : vector<4x1xf32> to vector<4x64xf32>
    %538 = arith.mulf %535, %537 : vector<4x64xf32>
    %539 = arith.addf %529, %538 : vector<4x64xf32>
    %540 = vector.extract_strided_slice %3 {offsets = [0, 18], sizes = [4, 46], strides = [1, 1]} : vector<4x64xf32> to vector<4x46xf32>
    %541 = vector.extract_strided_slice %3 {offsets = [0, 0], sizes = [4, 18], strides = [1, 1]} : vector<4x64xf32> to vector<4x18xf32>
    %542 = tpu.concatenate %540, %541 in 1 : vector<4x46xf32>, vector<4x18xf32> -> vector<4x64xf32>
    %543 = vector.extract_strided_slice %5 {offsets = [15, 0], sizes = [1, 64], strides = [1, 1]} : vector<16x64xf32> to vector<1x64xf32>
    %544 = vector.broadcast %543 : vector<1x64xf32> to vector<4x64xf32>
    %545 = arith.mulf %542, %544 : vector<4x64xf32>
    %546 = vector.extract_strided_slice %390 {offsets = [0, 15], sizes = [4, 1], strides = [1, 1]} : vector<4x16xf32> to vector<4x1xf32>
    %547 = vector.broadcast %546 : vector<4x1xf32> to vector<4x64xf32>
    %548 = arith.mulf %545, %547 : vector<4x64xf32>
    %549 = arith.addf %539, %548 : vector<4x64xf32>
    %550 = vector.extract_strided_slice %391 {offsets = [0, 0], sizes = [4, 1], strides = [1, 1]} : vector<4x3xf32> to vector<4x1xf32>
    %551 = vector.broadcast %550 : vector<4x1xf32> to vector<4x64xf32>
    %552 = arith.addf %549, %551 : vector<4x64xf32>
    %553 = vector.shape_cast %552 : vector<4x64xf32> to vector<1x4x64xf32>
    %cst_37 = arith.constant dense<0.000000e+00> : vector<1xf32>
    %554 = vector.multi_reduction <add>, %553, %cst_37 [1, 2] : vector<1x4x64xf32> to vector<1xf32>
    %555 = vector.shape_cast %554 : vector<1xf32> to vector<1x1x1xf32>
    %556 = vector.extract %555[0, 0, 0] : f32 from vector<1x1x1xf32>
    %cst_38 = arith.constant 3.906250e-03 : f32
    %557 = arith.mulf %556, %cst_38 : f32
    %558 = arith.mulf %552, %552 : vector<4x64xf32>
    %559 = vector.shape_cast %558 : vector<4x64xf32> to vector<1x4x64xf32>
    %cst_39 = arith.constant dense<0.000000e+00> : vector<1xf32>
    %560 = vector.multi_reduction <add>, %559, %cst_39 [1, 2] : vector<1x4x64xf32> to vector<1xf32>
    %561 = vector.shape_cast %560 : vector<1xf32> to vector<1x1x1xf32>
    %562 = vector.extract %561[0, 0, 0] : f32 from vector<1x1x1xf32>
    %cst_40 = arith.constant 3.906250e-03 : f32
    %563 = arith.mulf %562, %cst_40 : f32
    %564 = arith.mulf %557, %557 : f32
    %565 = arith.subf %563, %564 : f32
    %cst_41 = arith.constant 0.000000e+00 : f32
    %566 = arith.maximumf %565, %cst_41 : f32
    %567 = vector.broadcast %557 : f32 to vector<4x64xf32>
    %568 = arith.subf %552, %567 : vector<4x64xf32>
    %cst_42 = arith.constant 9.99999974E-6 : f32
    %569 = arith.addf %566, %cst_42 : f32
    %570 = math.rsqrt %569 : f32
    %571 = vector.broadcast %570 : f32 to vector<4x64xf32>
    %572 = arith.mulf %568, %571 : vector<4x64xf32>
    %573 = vector.extract_strided_slice %391 {offsets = [0, 1], sizes = [4, 1], strides = [1, 1]} : vector<4x3xf32> to vector<4x1xf32>
    %574 = vector.broadcast %573 : vector<4x1xf32> to vector<4x64xf32>
    %575 = arith.mulf %572, %574 : vector<4x64xf32>
    %576 = vector.extract_strided_slice %391 {offsets = [0, 2], sizes = [4, 1], strides = [1, 1]} : vector<4x3xf32> to vector<4x1xf32>
    %577 = vector.broadcast %576 : vector<4x1xf32> to vector<4x64xf32>
    %578 = arith.addf %575, %577 : vector<4x64xf32>
    %c0_43 = arith.constant 0 : index
    %c0_44 = arith.constant 0 : index
    %579 = vector.load %arg11[%c0_43, %c0_44] : memref<64x256xf32, #tpu.memory_space<vmem>>, vector<64x256xf32>
    %cst_45 = arith.constant dense<0.000000e+00> : vector<4x256xf32>
    %580 = tpu.matmul %200, %579, %cst_45 {dimension_numbers = #tpu.dot_dimension_numbers<[1], [0], [0], [1], [0, 0, 1, 1], [], []>} : vector<4x64xf32>, vector<64x256xf32>, vector<4x256xf32> -> vector<4x256xf32>
    %cst_46 = arith.constant dense<0.000000e+00> : vector<4x256xf32>
    %581 = tpu.matmul %578, %579, %cst_46 {dimension_numbers = #tpu.dot_dimension_numbers<[1], [0], [0], [1], [0, 0, 1, 1], [], []>} : vector<4x64xf32>, vector<64x256xf32>, vector<4x256xf32> -> vector<4x256xf32>
    %582 = arith.mulf %580, %389 : vector<4x256xf32>
    %583 = arith.addf %582, %581 : vector<4x256xf32>
    %c0_47 = arith.constant 0 : index
    %c0_48 = arith.constant 0 : index
    %c0_49 = arith.constant 0 : index
    %584 = vector.load %arg12[%c0_47, %c0_48, %c0_49] : memref<1x4x256xf32, #tpu.memory_space<vmem>>, vector<1x4x256xf32>
    %585 = vector.shape_cast %584 : vector<1x4x256xf32> to vector<4x256xf32>
    %586 = vector.shape_cast %583 : vector<4x256xf32> to vector<1x4x256xf32>
    tpu.vector_store %arg12[%c0_47, %c0_48, %c0_49], %586 {strides = array<i32>} : memref<1x4x256xf32, #tpu.memory_space<vmem>>, vector<1x4x256xf32>,
    return
  }
  func.func @transform_0(%arg0: i32) -> (i32, i32, i32) {
    %c0_i32 = arith.constant 0 : i32
    %c0_i32_0 = arith.constant 0 : i32
    %c0_i32_1 = arith.constant 0 : i32
    return %arg0, %c0_i32, %c0_i32_0 : i32, i32, i32
  }
  func.func @transform_1(%arg0: i32) -> (i32, i32, i32) {
    %c0_i32 = arith.constant 0 : i32
    %c0_i32_0 = arith.constant 0 : i32
    %c0_i32_1 = arith.constant 0 : i32
    return %arg0, %c0_i32, %c0_i32_0 : i32, i32, i32
  }
  func.func @transform_2(%arg0: i32) -> (i32, i32) {
    %c0_i32 = arith.constant 0 : i32
    %c0_i32_0 = arith.constant 0 : i32
    %c0_i32_1 = arith.constant 0 : i32
    return %c0_i32, %c0_i32_0 : i32, i32
  }
  func.func @transform_3(%arg0: i32) -> (i32, i32) {
    %c0_i32 = arith.constant 0 : i32
    %c0_i32_0 = arith.constant 0 : i32
    %c0_i32_1 = arith.constant 0 : i32
    return %c0_i32, %c0_i32_0 : i32, i32
  }
  func.func @transform_4(%arg0: i32) -> (i32, i32) {
    %c0_i32 = arith.constant 0 : i32
    %c0_i32_0 = arith.constant 0 : i32
    %c0_i32_1 = arith.constant 0 : i32
    return %c0_i32, %c0_i32_0 : i32, i32
  }
  func.func @transform_5(%arg0: i32) -> (i32, i32) {
    %c0_i32 = arith.constant 0 : i32
    %c0_i32_0 = arith.constant 0 : i32
    %c0_i32_1 = arith.constant 0 : i32
    return %c0_i32, %c0_i32_0 : i32, i32
  }
  func.func @transform_6(%arg0: i32) -> (i32, i32) {
    %c0_i32 = arith.constant 0 : i32
    %c0_i32_0 = arith.constant 0 : i32
    %c0_i32_1 = arith.constant 0 : i32
    return %c0_i32, %c0_i32_0 : i32, i32
  }
  func.func @transform_7(%arg0: i32) -> (i32, i32) {
    %c0_i32 = arith.constant 0 : i32
    %c0_i32_0 = arith.constant 0 : i32
    %c0_i32_1 = arith.constant 0 : i32
    return %c0_i32, %c0_i32_0 : i32, i32
  }
  func.func @transform_8(%arg0: i32) -> (i32, i32) {
    %c0_i32 = arith.constant 0 : i32
    %c0_i32_0 = arith.constant 0 : i32
    %c0_i32_1 = arith.constant 0 : i32
    return %c0_i32, %c0_i32_0 : i32, i32
  }
  func.func @transform_9(%arg0: i32) -> (i32, i32) {
    %c0_i32 = arith.constant 0 : i32
    %c0_i32_0 = arith.constant 0 : i32
    %c0_i32_1 = arith.constant 0 : i32
    return %c0_i32, %c0_i32_0 : i32, i32
  }
  func.func @transform_10(%arg0: i32) -> (i32, i32) {
    %c0_i32 = arith.constant 0 : i32
    %c0_i32_0 = arith.constant 0 : i32
    %c0_i32_1 = arith.constant 0 : i32
    return %c0_i32, %c0_i32_0 : i32, i32
  }
  func.func @transform_11(%arg0: i32) -> (i32, i32, i32) {
    %c0_i32 = arith.constant 0 : i32
    %c0_i32_0 = arith.constant 0 : i32
    %c0_i32_1 = arith.constant 0 : i32
    return %arg0, %c0_i32, %c0_i32_0 : i32, i32, i32
  }
}

</mosaic_0001>

<llo_original>
// kernel: tfar_forward.1
$region0: #{tfar_forward.1}
  #allocation0 [shape = 'u32[]', space=smem, size = 0x4, offset = 0x4, fixed_abs, tag = 'smem constant byte address 0x4 - core index']
  #allocation1 [shape = 'u32[144,128]{1,0:T(1,128)}', space=vmem, size = 0x12000, scoped, tag = 'internal scratch']
  %s0 = inlined_call_operand.vmem [shape: f32[2,4,256], index: 0, kind: input, shape index: {}]
  %s1 = inlined_call_operand.vmem [shape: f32[2,4,64], index: 1, kind: input, shape index: {}]
  %s2 = inlined_call_operand.vmem [shape: f32[16,256], index: 2, kind: input, shape index: {}]
  %s3 = inlined_call_operand.vmem [shape: f32[16,64], index: 3, kind: input, shape index: {}]
  %s4 = inlined_call_operand.vmem [shape: f32[4,16], index: 4, kind: input, shape index: {}]
  %s5 = inlined_call_operand.vmem [shape: f32[4,3], index: 5, kind: input, shape index: {}]
  %s6 = inlined_call_operand.vmem [shape: f32[4,16], index: 6, kind: input, shape index: {}]
  %s7 = inlined_call_operand.vmem [shape: f32[4,3], index: 7, kind: input, shape index: {}]
  %s8 = inlined_call_operand.vmem [shape: f32[4,16], index: 8, kind: input, shape index: {}]
  %s9 = inlined_call_operand.vmem [shape: f32[4,3], index: 9, kind: input, shape index: {}]
  %s10 = inlined_call_operand.vmem [shape: f32[64,256], index: 10, kind: input, shape index: {}]
  %s11 = inlined_call_operand.vmem [shape: f32[2,4,256], index: 11, kind: output, shape index: {}]
  %s12 = sld [smem:[#allocation0]]
  $region77: #{tfar_forward.1} parent=0
    _
  %s14 = ssub.s32 1, %s12
  %s15 = scalar_select 0, %s14, %s12
  loop: start=0, step=1, limit=4
  $region2: #{tfar_forward.1} parent=0 // loop_pre_header
    _
  $region3: #{tfar_forward.1} parent=0 // loop_header
    %s17 = sphi 0, %s21
    %p18 = scmp.ge.s32.totalorder %s17, 4
    %s27 = sphi 0, %s29
    %s30 = sphi 0, %s27
    %s31 = sphi 0, %s30
    %s47 = sphi 0, %s31
    %s53 = sphi 0, %s55
    %s56 = sphi 0, %s53
    %s57 = sphi 0, %s56
    %s73 = sphi 0, %s57
    %s77 = sphi 0, %s77
    %s79 = sphi 0, %s77
    %s80 = sphi 0, %s79
    %s94 = sphi 0, %s80
    %s98 = sphi 0, %s98
    %s100 = sphi 0, %s98
    %s101 = sphi 0, %s100
    %s115 = sphi 0, %s101
    %s119 = sphi 0, %s119
    %s121 = sphi 0, %s119
    %s122 = sphi 0, %s121
    %s136 = sphi 0, %s122
    %s140 = sphi 0, %s140
    %s142 = sphi 0, %s140
    %s143 = sphi 0, %s142
    %s157 = sphi 0, %s143
    %s161 = sphi 0, %s161
    %s163 = sphi 0, %s161
    %s164 = sphi 0, %s163
    %s178 = sphi 0, %s164
    %s182 = sphi 0, %s182
    %s184 = sphi 0, %s182
    %s185 = sphi 0, %s184
    %s199 = sphi 0, %s185
    %s203 = sphi 0, %s203
    %s205 = sphi 0, %s203
    %s206 = sphi 0, %s205
    %s220 = sphi 0, %s206
    %s224 = sphi 0, %s224
    %s226 = sphi 0, %s224
    %s227 = sphi 0, %s226
    %s241 = sphi 0, %s227
    %s245 = sphi 0, %s245
    %s247 = sphi 0, %s245
    %s248 = sphi 0, %s247
    %s262 = sphi 0, %s248
    %s268 = sphi 0, %s270
    %s271 = sphi 0, %s268
    %s272 = sphi 0, %s271
    %s288 = sphi 0, %s272
  $region4: #{tfar_forward.1} parent=0 // loop_header_branch
    %20 = sbr.rel (%p18) target = $region8
  $region5: #{tfar_forward.1} parent=0 // loop_body
    %s22 = ssub.s32 %s17, 1
    %s23 = ssub.s32 %s17, 2
    %s24 = sadd.s32 %s17, 1
    %s25 = ssub.s32 %s17, %s24
    %p26 = scmp.eq.s32.totalorder %s25, 0
    %s28 = sadd.s32 %s27, 1
    %s29 = scalar_select %p26, %s27, %s28
    %p32 = pneg %p26
    %p33 = scmp.eq.s32.totalorder %s17, 1
    %p34 = por %p32, %p33
    %p35 = scmp.ne.s32.totalorder %s27, %s30
    %p36 = scmp.eq.s32.totalorder %s17, 0
    %p37 = por %p35, %p36
    %p38 = scmp.ne.s32.totalorder %s27, %s30
    %p39 = scmp.eq.s32.totalorder %s22, 1
    %p40 = por %p38, %p39
    %p41 = scmp.ne.s32.totalorder %s30, %s31
    %p42 = scmp.eq.s32.totalorder %s22, 0
    %p43 = por %p41, %p42
    %p44 = scmp.ne.s32.totalorder %s30, %s31
    %p45 = scmp.eq.s32.totalorder %s23, 1
    %p46 = por %p44, %p45
    %p48 = scmp.ne.s32.totalorder %s31, %s47
    %p49 = scmp.eq.s32.totalorder %s23, 0
    %p50 = por %p48, %p49
    %s51 = ssub.s32 %s17, %s24
    %p52 = scmp.eq.s32.totalorder %s51, 0
    %s54 = sadd.s32 %s53, 1
    %s55 = scalar_select %p52, %s53, %s54
    %p58 = pneg %p52
    %p59 = scmp.eq.s32.totalorder %s17, 1
    %p60 = por %p58, %p59
    %p61 = scmp.ne.s32.totalorder %s53, %s56
    %p62 = scmp.eq.s32.totalorder %s17, 0
    %p63 = por %p61, %p62
    %p64 = scmp.ne.s32.totalorder %s53, %s56
    %p65 = scmp.eq.s32.totalorder %s22, 1
    %p66 = por %p64, %p65
    %p67 = scmp.ne.s32.totalorder %s56, %s57
    %p68 = scmp.eq.s32.totalorder %s22, 0
    %p69 = por %p67, %p68
    %p70 = scmp.ne.s32.totalorder %s56, %s57
    %p71 = scmp.eq.s32.totalorder %s23, 1
    %p72 = por %p70, %p71
    %p74 = scmp.ne.s32.totalorder %s57, %s73
    %p75 = scmp.eq.s32.totalorder %s23, 0
    %p76 = por %p74, %p75
    %s78 = sadd.s32 %s77, 1
    %p81 = scmp.eq.s32.totalorder %s17, 1
    %p82 = scmp.ne.s32.totalorder %s77, %s79
    %p83 = scmp.eq.s32.totalorder %s17, 0
    %p84 = por %p82, %p83
    %p85 = scmp.ne.s32.totalorder %s77, %s79
    %p86 = scmp.eq.s32.totalorder %s22, 1
    %p87 = por %p85, %p86
    %p88 = scmp.ne.s32.totalorder %s79, %s80
    %p89 = scmp.eq.s32.totalorder %s22, 0
    %p90 = por %p88, %p89
    %p91 = scmp.ne.s32.totalorder %s79, %s80
    %p92 = scmp.eq.s32.totalorder %s23, 1
    %p93 = por %p91, %p92
    %p95 = scmp.ne.s32.totalorder %s80, %s94
    %p96 = scmp.eq.s32.totalorder %s23, 0
    %p97 = por %p95, %p96
    %s99 = sadd.s32 %s98, 1
    %p102 = scmp.eq.s32.totalorder %s17, 1
    %p103 = scmp.ne.s32.totalorder %s98, %s100
    %p104 = scmp.eq.s32.totalorder %s17, 0
    %p105 = por %p103, %p104
    %p106 = scmp.ne.s32.totalorder %s98, %s100
    %p107 = scmp.eq.s32.totalorder %s22, 1
    %p108 = por %p106, %p107
    %p109 = scmp.ne.s32.totalorder %s100, %s101
    %p110 = scmp.eq.s32.totalorder %s22, 0
    %p111 = por %p109, %p110
    %p112 = scmp.ne.s32.totalorder %s100, %s101
    %p113 = scmp.eq.s32.totalorder %s23, 1
    %p114 = por %p112, %p113
    %p116 = scmp.ne.s32.totalorder %s101, %s115
    %p117 = scmp.eq.s32.totalorder %s23, 0
    %p118 = por %p116, %p117
    %s120 = sadd.s32 %s119, 1
    %p123 = scmp.eq.s32.totalorder %s17, 1
    %p124 = scmp.ne.s32.totalorder %s119, %s121
    %p125 = scmp.eq.s32.totalorder %s17, 0
    %p126 = por %p124, %p125
    %p127 = scmp.ne.s32.totalorder %s119, %s121
    %p128 = scmp.eq.s32.totalorder %s22, 1
    %p129 = por %p127, %p128
    %p130 = scmp.ne.s32.totalorder %s121, %s122
    %p131 = scmp.eq.s32.totalorder %s22, 0
    %p132 = por %p130, %p131
    %p133 = scmp.ne.s32.totalorder %s121, %s122
    %p134 = scmp.eq.s32.totalorder %s23, 1
    %p135 = por %p133, %p134
    %p137 = scmp.ne.s32.totalorder %s122, %s136
    %p138 = scmp.eq.s32.totalorder %s23, 0
    %p139 = por %p137, %p138
    %s141 = sadd.s32 %s140, 1
    %p144 = scmp.eq.s32.totalorder %s17, 1
    %p145 = scmp.ne.s32.totalorder %s140, %s142
    %p146 = scmp.eq.s32.totalorder %s17, 0
    %p147 = por %p145, %p146
    %p148 = scmp.ne.s32.totalorder %s140, %s142
    %p149 = scmp.eq.s32.totalorder %s22, 1
    %p150 = por %p148, %p149
    %p151 = scmp.ne.s32.totalorder %s142, %s143
    %p152 = scmp.eq.s32.totalorder %s22, 0
    %p153 = por %p151, %p152
    %p154 = scmp.ne.s32.totalorder %s142, %s143
    %p155 = scmp.eq.s32.totalorder %s23, 1
    %p156 = por %p154, %p155
    %p158 = scmp.ne.s32.totalorder %s143, %s157
    %p159 = scmp.eq.s32.totalorder %s23, 0
    %p160 = por %p158, %p159
    %s162 = sadd.s32 %s161, 1
    %p165 = scmp.eq.s32.totalorder %s17, 1
    %p166 = scmp.ne.s32.totalorder %s161, %s163
    %p167 = scmp.eq.s32.totalorder %s17, 0
    %p168 = por %p166, %p167
    %p169 = scmp.ne.s32.totalorder %s161, %s163
    %p170 = scmp.eq.s32.totalorder %s22, 1
    %p171 = por %p169, %p170
    %p172 = scmp.ne.s32.totalorder %s163, %s164
    %p173 = scmp.eq.s32.totalorder %s22, 0
    %p174 = por %p172, %p173
    %p175 = scmp.ne.s32.totalorder %s163, %s164
    %p176 = scmp.eq.s32.totalorder %s23, 1
    %p177 = por %p175, %p176
    %p179 = scmp.ne.s32.totalorder %s164, %s178
    %p180 = scmp.eq.s32.totalorder %s23, 0
    %p181 = por %p179, %p180
    %s183 = sadd.s32 %s182, 1
    %p186 = scmp.eq.s32.totalorder %s17, 1
    %p187 = scmp.ne.s32.totalorder %s182, %s184
    %p188 = scmp.eq.s32.totalorder %s17, 0
    %p189 = por %p187, %p188
    %p190 = scmp.ne.s32.totalorder %s182, %s184
    %p191 = scmp.eq.s32.totalorder %s22, 1
    %p192 = por %p190, %p191
    %p193 = scmp.ne.s32.totalorder %s184, %s185
    %p194 = scmp.eq.s32.totalorder %s22, 0
    %p195 = por %p193, %p194
    %p196 = scmp.ne.s32.totalorder %s184, %s185
    %p197 = scmp.eq.s32.totalorder %s23, 1
    %p198 = por %p196, %p197
    %p200 = scmp.ne.s32.totalorder %s185, %s199
    %p201 = scmp.eq.s32.totalorder %s23, 0
    %p202 = por %p200, %p201
    %s204 = sadd.s32 %s203, 1
    %p207 = scmp.eq.s32.totalorder %s17, 1
    %p208 = scmp.ne.s32.totalorder %s203, %s205
    %p209 = scmp.eq.s32.totalorder %s17, 0
    %p210 = por %p208, %p209
    %p211 = scmp.ne.s32.totalorder %s203, %s205
    %p212 = scmp.eq.s32.totalorder %s22, 1
    %p213 = por %p211, %p212
    %p214 = scmp.ne.s32.totalorder %s205, %s206
    %p215 = scmp.eq.s32.totalorder %s22, 0
    %p216 = por %p214, %p215
    %p217 = scmp.ne.s32.totalorder %s205, %s206
    %p218 = scmp.eq.s32.totalorder %s23, 1
    %p219 = por %p217, %p218
    %p221 = scmp.ne.s32.totalorder %s206, %s220
    %p222 = scmp.eq.s32.totalorder %s23, 0
    %p223 = por %p221, %p222
    %s225 = sadd.s32 %s224, 1
    %p228 = scmp.eq.s32.totalorder %s17, 1
    %p229 = scmp.ne.s32.totalorder %s224, %s226
    %p230 = scmp.eq.s32.totalorder %s17, 0
    %p231 = por %p229, %p230
    %p232 = scmp.ne.s32.totalorder %s224, %s226
    %p233 = scmp.eq.s32.totalorder %s22, 1
    %p234 = por %p232, %p233
    %p235 = scmp.ne.s32.totalorder %s226, %s227
    %p236 = scmp.eq.s32.totalorder %s22, 0
    %p237 = por %p235, %p236
    %p238 = scmp.ne.s32.totalorder %s226, %s227
    %p239 = scmp.eq.s32.totalorder %s23, 1
    %p240 = por %p238, %p239
    %p242 = scmp.ne.s32.totalorder %s227, %s241
    %p243 = scmp.eq.s32.totalorder %s23, 0
    %p244 = por %p242, %p243
    %s246 = sadd.s32 %s245, 1
    %p249 = scmp.eq.s32.totalorder %s17, 1
    %p250 = scmp.ne.s32.totalorder %s245, %s247
    %p251 = scmp.eq.s32.totalorder %s17, 0
    %p252 = por %p250, %p251
    %p253 = scmp.ne.s32.totalorder %s245, %s247
    %p254 = scmp.eq.s32.totalorder %s22, 1
    %p255 = por %p253, %p254
    %p256 = scmp.ne.s32.totalorder %s247, %s248
    %p257 = scmp.eq.s32.totalorder %s22, 0
    %p258 = por %p256, %p257
    %p259 = scmp.ne.s32.totalorder %s247, %s248
    %p260 = scmp.eq.s32.totalorder %s23, 1
    %p261 = por %p259, %p260
    %p263 = scmp.ne.s32.totalorder %s248, %s262
    %p264 = scmp.eq.s32.totalorder %s23, 0
    %p265 = por %p263, %p264
    %s266 = ssub.s32 %s17, %s24
    %p267 = scmp.eq.s32.totalorder %s266, 0
    %s269 = sadd.s32 %s268, 1
    %s270 = scalar_select %p267, %s268, %s269
    %p273 = pneg %p267
    %p274 = scmp.eq.s32.totalorder %s17, 1
    %p275 = por %p273, %p274
    %p276 = scmp.ne.s32.totalorder %s268, %s271
    %p277 = scmp.eq.s32.totalorder %s17, 0
    %p278 = por %p276, %p277
    %p279 = scmp.ne.s32.totalorder %s268, %s271
    %p280 = scmp.eq.s32.totalorder %s22, 1
    %p281 = por %p279, %p280
    %p282 = scmp.ne.s32.totalorder %s271, %s272
    %p283 = scmp.eq.s32.totalorder %s22, 0
    %p284 = por %p282, %p283
    %p285 = scmp.ne.s32.totalorder %s271, %s272
    %p286 = scmp.eq.s32.totalorder %s23, 1
    %p287 = por %p285, %p286
    %p289 = scmp.ne.s32.totalorder %s272, %s288
    %p290 = scmp.eq.s32.totalorder %s23, 0
    %p291 = por %p289, %p290
    %p292 = scmp.le.s32.totalorder 1, %s17
    %p293 = scmp.lt.s32.totalorder %s17, 3
    %p294 = pnand %p292, %p293
    %p295 = pneg %p294
    // Predicated region
    $region9: #{tfar_forward.1} parent=5 // pred_check
      _
    $region10: #{tfar_forward.1} parent=5 // pred_check_branch
      %297 = sbr.rel (%p294) target = $region12
    $region11: #{tfar_forward.1} parent=5 // pred_region
      %s298 = ssub.s32 %s17, 1
      // Predicated region
      $region13: #{tfar_forward.1} parent=11 // pred_check
        %p299 = pneg %p90
      $region14: #{tfar_forward.1} parent=11 // pred_check_branch
        %301 = sbr.rel (%p299) target = $region16
      $region15: #{tfar_forward.1} parent=11 // pred_region
        _
      $region16: #{tfar_forward.1} parent=11 // pred_fallthru
        _
      // Predicated region
      $region17: #{tfar_forward.1} parent=11 // pred_check
        %p302 = pneg %p111
      $region18: #{tfar_forward.1} parent=11 // pred_check_branch
        %304 = sbr.rel (%p302) target = $region20
      $region19: #{tfar_forward.1} parent=11 // pred_region
        _
      $region20: #{tfar_forward.1} parent=11 // pred_fallthru
        _
      // Predicated region
      $region21: #{tfar_forward.1} parent=11 // pred_check
        %p305 = pneg %p132
      $region22: #{tfar_forward.1} parent=11 // pred_check_branch
        %307 = sbr.rel (%p305) target = $region24
      $region23: #{tfar_forward.1} parent=11 // pred_region
        _
      $region24: #{tfar_forward.1} parent=11 // pred_fallthru
        _
      // Predicated region
      $region25: #{tfar_forward.1} parent=11 // pred_check
        %p308 = pneg %p153
      $region26: #{tfar_forward.1} parent=11 // pred_check_branch
        %310 = sbr.rel (%p308) target = $region28
      $region27: #{tfar_forward.1} parent=11 // pred_region
        _
      $region28: #{tfar_forward.1} parent=11 // pred_fallthru
        _
      // Predicated region
      $region29: #{tfar_forward.1} parent=11 // pred_check
        %p311 = pneg %p174
      $region30: #{tfar_forward.1} parent=11 // pred_check_branch
        %313 = sbr.rel (%p311) target = $region32
      $region31: #{tfar_forward.1} parent=11 // pred_region
        _
      $region32: #{tfar_forward.1} parent=11 // pred_fallthru
        _
      // Predicated region
      $region33: #{tfar_forward.1} parent=11 // pred_check
        %p314 = pneg %p195
      $region34: #{tfar_forward.1} parent=11 // pred_check_branch
        %316 = sbr.rel (%p314) target = $region36
      $region35: #{tfar_forward.1} parent=11 // pred_region
        _
      $region36: #{tfar_forward.1} parent=11 // pred_fallthru
        _
      // Predicated region
      $region37: #{tfar_forward.1} parent=11 // pred_check
        %p317 = pneg %p216
      $region38: #{tfar_forward.1} parent=11 // pred_check_branch
        %319 = sbr.rel (%p317) target = $region40
      $region39: #{tfar_forward.1} parent=11 // pred_region
        _
      $region40: #{tfar_forward.1} parent=11 // pred_fallthru
        _
      // Predicated region
      $region41: #{tfar_forward.1} parent=11 // pred_check
        %p320 = pneg %p237
      $region42: #{tfar_forward.1} parent=11 // pred_check_branch
        %322 = sbr.rel (%p320) target = $region44
      $region43: #{tfar_forward.1} parent=11 // pred_region
        _
      $region44: #{tfar_forward.1} parent=11 // pred_fallthru
        _
      // Predicated region
      $region45: #{tfar_forward.1} parent=11 // pred_check
        %p323 = pneg %p258
      $region46: #{tfar_forward.1} parent=11 // pred_check_branch
        %325 = sbr.rel (%p323) target = $region48
      $region47: #{tfar_forward.1} parent=11 // pred_region
        _
      $region48: #{tfar_forward.1} parent=11 // pred_fallthru
        _
    $region12: #{tfar_forward.1} parent=5 // pred_fallthru
      _
    %p326 = scmp.lt.s32.totalorder %s17, 2
    // Predicated region
    $region49: #{tfar_forward.1} parent=5 // pred_check
      %p327 = pneg %p326
    $region50: #{tfar_forward.1} parent=5 // pred_check_branch
      %329 = sbr.rel (%p327) target = $region52
    $region51: #{tfar_forward.1} parent=5 // pred_region
      // Predicated region
      $region53: #{tfar_forward.1} parent=51 // pred_check
        %p330 = pneg %p37
      $region54: #{tfar_forward.1} parent=51 // pred_check_branch
        %332 = sbr.rel (%p330) target = $region56
      $region55: #{tfar_forward.1} parent=51 // pred_region
        %p333 = scmp.lt.s32.totalorder %s17, 1
        %s334 = scalar_select %p333, %s17, 1
        %s335 = smul.addr %s334, 2
        %s336 = smul.addr %s335, 4
        %s337 = scalar_lea.vmem %s0, %s336
      $region56: #{tfar_forward.1} parent=51 // pred_fallthru
        _
      // Predicated region
      $region57: #{tfar_forward.1} parent=51 // pred_check
        %p338 = pneg %p63
      $region58: #{tfar_forward.1} parent=51 // pred_check_branch
        %340 = sbr.rel (%p338) target = $region60
      $region59: #{tfar_forward.1} parent=51 // pred_region
        %p341 = scmp.lt.s32.totalorder %s17, 1
        %s342 = scalar_select %p341, %s17, 1
        %s343 = smul.addr %s342, 4
        %s344 = scalar_lea.vmem %s1, %s343
      $region60: #{tfar_forward.1} parent=51 // pred_fallthru
        _
    $region52: #{tfar_forward.1} parent=5 // pred_fallthru
      _
    %p345 = scmp.le.s32.totalorder 1, %s17
    %p346 = scmp.lt.s32.totalorder %s17, 3
    %p347 = pnand %p345, %p346
    %p348 = pneg %p347
    // Predicated region
    $region61: #{tfar_forward.1} parent=5 // pred_check
      _
    $region62: #{tfar_forward.1} parent=5 // pred_check_branch
      %350 = sbr.rel (%p347) target = $region64
    $region63: #{tfar_forward.1} parent=5 // pred_region
      %s351 = ssub.s32 %s17, 1
      %p352 = scmp.lt.s32.totalorder %s22, 1
      %s353 = scalar_select %p352, %s22, 1
      %s354 = smul.addr %s353, 2
      %s355 = smul.addr %s354, 4
      %s356 = scalar_lea.vmem %s0, %s355
      %p357 = pneg %p43
      %p358 = pneg %p40
      %p359 = scmp.lt.s32.totalorder %s22, 1
      %s360 = scalar_select %p359, %s22, 1
      %s361 = smul.addr %s360, 4
      %s362 = scalar_lea.vmem %s1, %s361
      %p363 = pneg %p69
      %p364 = pneg %p66
      %p365 = pneg %p90
      %p366 = pneg %p87
      %p367 = pneg %p111
      %p368 = pneg %p108
      %p369 = pneg %p132
      %p370 = pneg %p129
      %p371 = pneg %p153
      %p372 = pneg %p150
      %p373 = pneg %p174
      %p374 = pneg %p171
      %p375 = pneg %p195
      %p376 = pneg %p192
      %p377 = pneg %p216
      %p378 = pneg %p213
      %p379 = pneg %p237
      %p380 = pneg %p234
      %p381 = pneg %p258
      %p382 = pneg %p255
      %p383 = pneg %p284
      %p384 = pneg %p281
      %p385 = scmp.lt.s32.totalorder %s22, 1
      %s386 = scalar_select %p385, %s22, 1
      %s387 = smul.addr %s386, 2
      %s388 = smul.addr %s387, 4
      %s389 = scalar_lea.vmem %s11, %s388
      %p390 = scmp.lt.s32.totalorder %s22, 1
      %s391 = scalar_select %p390, %s22, 1
      %s392 = smul.addr %s391, 2
      %s393 = smul.addr %s392, 4
      %s394 = scalar_lea.vmem %s0, %s393
      %p395 = scmp.lt.s32.totalorder %s22, 1
      %s396 = scalar_select %p395, %s22, 1
      %s397 = smul.addr %s396, 4
      %s398 = scalar_lea.vmem %s1, %s397
      %p399 = scmp.lt.s32.totalorder %s22, 1
      %s400 = scalar_select %p399, %s22, 1
      %s401 = smul.addr %s400, 2
      %s402 = smul.addr %s401, 4
      %s403 = scalar_lea.vmem %s11, %s402
      %v404 = vld [vmem:[%s394] sm:$0xff]
      %v405 = vld [vmem:[%s398] sm:$0xf]
      %v406 = vld [vmem:[%s2] sm:$0xff]
      %v407 = vld [vmem:[%s2 + $0x8] sm:$0xff]
      %v408 = vld [vmem:[%s2 + $0x10] sm:$0xff]
      %v409 = vld [vmem:[%s2 + $0x18] sm:$0xff]
      %v410 = vld [vmem:[%s3] sm:$0xff]
      %v411 = vld [vmem:[%s3 + $0x8] sm:$0xff]
      %v412 = vld [vmem:[%s4] sm:$0xf]
      %v413 = vld [vmem:[%s5] sm:$0xf]
      %415 = vrot.lane.b32.xlu0 %v405, 73
      %v416 = vpop.permute.xlu0 %415
      %418 = vrot.lane.b32.xlu0 %v405, 9
      %v419 = vpop.permute.xlu0 %418
      %vm421 = vcmask 72704
      %v422 = vsel %vm421, %v416, %v419
      %v423 = vlaneseq
      %v424 = vshrl.u32 %v423, 7
      %v425 = vsub.s32 0, %v424
      %v426 = vrot.slane %v410, %v425
      %v427 = vmul.f32 %v422, %v426
      %429 = vset.pattern.permute.xlu0 0
      %430 = vperm.xlu0 %429, %v412
      %v431 = vpop.permute.xlu0 %430
      %v433 = vmul.f32 %v427, %v431
      %v434 = vadd.f32 %v433, 0.0
      %435 = vrot.lane.b32.xlu0 %v405, 72
      %v436 = vpop.permute.xlu0 %435
      %438 = vrot.lane.b32.xlu0 %v405, 8
      %v439 = vpop.permute.xlu0 %438
      %vm441 = vcmask 64512
      %v442 = vsel %vm441, %v436, %v439
      %v443 = vlaneseq
      %v444 = vshrl.u32 %v443, 7
      %v445 = vsub.s32 1, %v444
      %v446 = vrot.slane %v410, %v445
      %v447 = vmul.f32 %v442, %v446
      %448 = vset.pattern.permute.xlu0 1
      %449 = vperm.xlu0 %448, %v412
      %v450 = vpop.permute.xlu0 %449
      %v452 = vmul.f32 %v447, %v450
      %v453 = vadd.f32 %v434, %v452
      %454 = vrot.lane.b32.xlu0 %v405, 71
      %v455 = vpop.permute.xlu0 %454
      %457 = vrot.lane.b32.xlu0 %v405, 7
      %v458 = vpop.permute.xlu0 %457
      %vm460 = vcmask 56320
      %v461 = vsel %vm460, %v455, %v458
      %v462 = vlaneseq
      %v463 = vshrl.u32 %v462, 7
      %v464 = vsub.s32 2, %v463
      %v465 = vrot.slane %v410, %v464
      %v466 = vmul.f32 %v461, %v465
      %467 = vset.pattern.permute.xlu0 2
      %468 = vperm.xlu0 %467, %v412
      %v469 = vpop.permute.xlu0 %468
      %v471 = vmul.f32 %v466, %v469
      %v472 = vadd.f32 %v453, %v471
      %473 = vrot.lane.b32.xlu0 %v405, 70
      %v474 = vpop.permute.xlu0 %473
      %476 = vrot.lane.b32.xlu0 %v405, 6
      %v477 = vpop.permute.xlu0 %476
      %vm479 = vcmask 48128
      %v480 = vsel %vm479, %v474, %v477
      %v481 = vlaneseq
      %v482 = vshrl.u32 %v481, 7
      %v483 = vsub.s32 3, %v482
      %v484 = vrot.slane %v410, %v483
      %v485 = vmul.f32 %v480, %v484
      %486 = vset.pattern.permute.xlu0 3
      %487 = vperm.xlu0 %486, %v412
      %v488 = vpop.permute.xlu0 %487
      %v490 = vmul.f32 %v485, %v488
      %v491 = vadd.f32 %v472, %v490
      %492 = vrot.lane.b32.xlu0 %v405, 65
      %v493 = vpop.permute.xlu0 %492
      %495 = vrot.lane.b32.xlu0 %v405, 1
      %v496 = vpop.permute.xlu0 %495
      %vm498 = vcmask 7168
      %v499 = vsel %vm498, %v493, %v496
      %v500 = vlaneseq
      %v501 = vshrl.u32 %v500, 7
      %v502 = vsub.s32 4, %v501
      %v503 = vrot.slane %v410, %v502
      %v504 = vmul.f32 %v499, %v503
      %505 = vset.pattern.permute.xlu0 4
      %506 = vperm.xlu0 %505, %v412
      %v507 = vpop.permute.xlu0 %506
      %v509 = vmul.f32 %v504, %v507
      %v510 = vadd.f32 %v491, %v509
      %v511 = vlaneseq
      %v512 = vshrl.u32 %v511, 7
      %v513 = vsub.s32 5, %v512
      %v514 = vrot.slane %v410, %v513
      %v515 = vmul.f32 %v405, %v514
      %516 = vset.pattern.permute.xlu0 5
      %517 = vperm.xlu0 %516, %v412
      %v518 = vpop.permute.xlu0 %517
      %v520 = vmul.f32 %v515, %v518
      %v521 = vadd.f32 %v510, %v520
      %522 = vrot.lane.b32.xlu0 %v405, 127
      %v523 = vpop.permute.xlu0 %522
      %525 = vrot.lane.b32.xlu0 %v405, 63
      %v526 = vpop.permute.xlu0 %525
      %vm528 = vcmask 515072
      %v529 = vsel %vm528, %v523, %v526
      %v530 = vlaneseq
      %v531 = vshrl.u32 %v530, 7
      %v532 = vsub.s32 6, %v531
      %v533 = vrot.slane %v410, %v532
      %v534 = vmul.f32 %v529, %v533
      %535 = vset.pattern.permute.xlu0 6
      %536 = vperm.xlu0 %535, %v412
      %v537 = vpop.permute.xlu0 %536
      %v539 = vmul.f32 %v534, %v537
      %v540 = vadd.f32 %v521, %v539
      %541 = vrot.lane.b32.xlu0 %v405, 126
      %v542 = vpop.permute.xlu0 %541
      %544 = vrot.lane.b32.xlu0 %v405, 62
      %v545 = vpop.permute.xlu0 %544
      %vm547 = vcmask 506880
      %v548 = vsel %vm547, %v542, %v545
      %v549 = vlaneseq
      %v550 = vshrl.u32 %v549, 7
      %v551 = vsub.s32 7, %v550
      %v552 = vrot.slane %v410, %v551
      %v553 = vmul.f32 %v548, %v552
      %554 = vset.pattern.permute.xlu0 7
      %555 = vperm.xlu0 %554, %v412
      %v556 = vpop.permute.xlu0 %555
      %v558 = vmul.f32 %v553, %v556
      %v559 = vadd.f32 %v540, %v558
      %560 = vrot.lane.b32.xlu0 %v405, 121
      %v561 = vpop.permute.xlu0 %560
      %563 = vrot.lane.b32.xlu0 %v405, 57
      %v564 = vpop.permute.xlu0 %563
      %vm566 = vcmask 465920
      %v567 = vsel %vm566, %v561, %v564
      %v568 = vlaneseq
      %v569 = vshrl.u32 %v568, 7
      %v570 = vsub.s32 0, %v569
      %v571 = vrot.slane %v411, %v570
      %v572 = vmul.f32 %v567, %v571
      %573 = vset.pattern.permute.xlu0 8
      %574 = vperm.xlu0 %573, %v412
      %v575 = vpop.permute.xlu0 %574
      %v577 = vmul.f32 %v572, %v575
      %v578 = vadd.f32 %v559, %v577
      %579 = vrot.lane.b32.xlu0 %v405, 120
      %v580 = vpop.permute.xlu0 %579
      %582 = vrot.lane.b32.xlu0 %v405, 56
      %v583 = vpop.permute.xlu0 %582
      %vm585 = vcmask 457728
      %v586 = vsel %vm585, %v580, %v583
      %v587 = vlaneseq
      %v588 = vshrl.u32 %v587, 7
      %v589 = vsub.s32 1, %v588
      %v590 = vrot.slane %v411, %v589
      %v591 = vmul.f32 %v586, %v590
      %592 = vset.pattern.permute.xlu0 9
      %593 = vperm.xlu0 %592, %v412
      %v594 = vpop.permute.xlu0 %593
      %v596 = vmul.f32 %v591, %v594
      %v597 = vadd.f32 %v578, %v596
      %598 = vrot.lane.b32.xlu0 %v405, 119
      %v599 = vpop.permute.xlu0 %598
      %601 = vrot.lane.b32.xlu0 %v405, 55
      %v602 = vpop.permute.xlu0 %601
      %vm604 = vcmask 449536
      %v605 = vsel %vm604, %v599, %v602
      %v606 = vlaneseq
      %v607 = vshrl.u32 %v606, 7
      %v608 = vsub.s32 2, %v607
      %v609 = vrot.slane %v411, %v608
      %v610 = vmul.f32 %v605, %v609
      %611 = vset.pattern.permute.xlu0 10
      %612 = vperm.xlu0 %611, %v412
      %v613 = vpop.permute.xlu0 %612
      %v615 = vmul.f32 %v610, %v613
      %v616 = vadd.f32 %v597, %v615
      %617 = vrot.lane.b32.xlu0 %v405, 118
      %v618 = vpop.permute.xlu0 %617
      %620 = vrot.lane.b32.xlu0 %v405, 54
      %v621 = vpop.permute.xlu0 %620
      %vm623 = vcmask 441344
      %v624 = vsel %vm623, %v618, %v621
      %v625 = vlaneseq
      %v626 = vshrl.u32 %v625, 7
      %v627 = vsub.s32 3, %v626
      %v628 = vrot.slane %v411, %v627
      %v629 = vmul.f32 %v624, %v628
      %630 = vset.pattern.permute.xlu0 11
      %631 = vperm.xlu0 %630, %v412
      %v632 = vpop.permute.xlu0 %631
      %v634 = vmul.f32 %v629, %v632
      %v635 = vadd.f32 %v616, %v634
      %636 = vrot.lane.b32.xlu0 %v405, 113
      %v637 = vpop.permute.xlu0 %636
      %639 = vrot.lane.b32.xlu0 %v405, 49
      %v640 = vpop.permute.xlu0 %639
      %vm642 = vcmask 400384
      %v643 = vsel %vm642, %v637, %v640
      %v644 = vlaneseq
      %v645 = vshrl.u32 %v644, 7
      %v646 = vsub.s32 4, %v645
      %v647 = vrot.slane %v411, %v646
      %v648 = vmul.f32 %v643, %v647
      %649 = vset.pattern.permute.xlu0 12
      %650 = vperm.xlu0 %649, %v412
      %v651 = vpop.permute.xlu0 %650
      %v653 = vmul.f32 %v648, %v651
      %v654 = vadd.f32 %v635, %v653
      %655 = vrot.lane.b32.xlu0 %v405, 112
      %v656 = vpop.permute.xlu0 %655
      %658 = vrot.lane.b32.xlu0 %v405, 48
      %v659 = vpop.permute.xlu0 %658
      %vm661 = vcmask 392192
      %v662 = vsel %vm661, %v656, %v659
      %v663 = vlaneseq
      %v664 = vshrl.u32 %v663, 7
      %v665 = vsub.s32 5, %v664
      %v666 = vrot.slane %v411, %v665
      %v667 = vmul.f32 %v662, %v666
      %668 = vset.pattern.permute.xlu0 13
      %669 = vperm.xlu0 %668, %v412
      %v670 = vpop.permute.xlu0 %669
      %v672 = vmul.f32 %v667, %v670
      %v673 = vadd.f32 %v654, %v672
      %674 = vrot.lane.b32.xlu0 %v405, 111
      %v675 = vpop.permute.xlu0 %674
      %677 = vrot.lane.b32.xlu0 %v405, 47
      %v678 = vpop.permute.xlu0 %677
      %vm680 = vcmask 384000
      %v681 = vsel %vm680, %v675, %v678
      %v682 = vlaneseq
      %v683 = vshrl.u32 %v682, 7
      %v684 = vsub.s32 6, %v683
      %v685 = vrot.slane %v411, %v684
      %v686 = vmul.f32 %v681, %v685
      %687 = vset.pattern.permute.xlu0 14
      %688 = vperm.xlu0 %687, %v412
      %v689 = vpop.permute.xlu0 %688
      %v691 = vmul.f32 %v686, %v689
      %v692 = vadd.f32 %v673, %v691
      %693 = vrot.lane.b32.xlu0 %v405, 110
      %v694 = vpop.permute.xlu0 %693
      %696 = vrot.lane.b32.xlu0 %v405, 46
      %v697 = vpop.permute.xlu0 %696
      %vm699 = vcmask 375808
      %v700 = vsel %vm699, %v694, %v697
      %v701 = vlaneseq
      %v702 = vshrl.u32 %v701, 7
      %v703 = vsub.s32 7, %v702
      %v704 = vrot.slane %v411, %v703
      %v705 = vmul.f32 %v700, %v704
      %706 = vset.pattern.permute.xlu0 15
      %707 = vperm.xlu0 %706, %v412
      %v708 = vpop.permute.xlu0 %707
      %v710 = vmul.f32 %v705, %v708
      %v711 = vadd.f32 %v692, %v710
      %713 = vset.pattern.permute.xlu0 0
      %714 = vperm.xlu0 %713, %v413
      %v715 = vpop.permute.xlu0 %714
      %v717 = vadd.f32 %v711, %v715
      %vm718 = vcmask 519168
      %v719 = vsel %vm718, %v717, 0.0
      %720 = vadd.xlane.f32.xlu0 %v719
      %v721 = vpop.xlane.xlu0 %720
      %v722 = vrot.slane %v721, 4
      %v723 = vadd.f32 %v721, %v722
      %v724 = vrot.slane %v723, 2
      %v725 = vadd.f32 %v723, %v724
      %v726 = vrot.slane %v725, 1
      %v727 = vadd.f32 %v725, %v726
      %s728 = vtos %v727
      %s729 = smul.f32 %s728, 0.00390625
      %v730 = vmul.f32 %v717, %v717
      %v731 = vsel %vm718, %v730, 0.0
      %732 = vadd.xlane.f32.xlu0 %v731
      %v733 = vpop.xlane.xlu0 %732
      %v734 = vrot.slane %v733, 4
      %v735 = vadd.f32 %v733, %v734
      %v736 = vrot.slane %v735, 2
      %v737 = vadd.f32 %v735, %v736
      %v738 = vrot.slane %v737, 1
      %v739 = vadd.f32 %v737, %v738
      %s740 = vtos %v739
      %s741 = smul.f32 %s740, 0.00390625
      %s742 = smul.f32 %s729, %s729
      %s743 = ssub.f32 %s741, %s742
      %s744 = smax.f32 %s743, 0.0
      %v745 = vstv %s729
      %v746 = vsub.f32 %v717, %v745
      %s747 = sadd.f32 %s744, 1e-05
      %v748 = vstv %s747
      %v749 = vrsqrt.pop %v748
      %s750 = vtos %v749
      %v751 = vstv %s750
      %v752 = vmul.f32 %v746, %v751
      %753 = vset.pattern.permute.xlu0 1
      %754 = vperm.xlu0 %753, %v413
      %v755 = vpop.permute.xlu0 %754
      %v757 = vmul.f32 %v752, %v755
      %758 = vset.pattern.permute.xlu0 2
      %759 = vperm.xlu0 %758, %v413
      %v760 = vpop.permute.xlu0 %759
      %v762 = vadd.f32 %v757, %v760
      %v763 = vsub.f32 0.0, %v762
      %v764 = vmul.f32 %v763, 1.442695
      %v765 = vpow.pop %v764
      %v766 = vadd.f32 %v765, 1.0
      %v767 = vrcp.pop %v766
      %v768 = vld [vmem:[%s6] sm:$0xf]
      %v769 = vld [vmem:[%s7] sm:$0xf]
      %v771 = vcombine.high %v404, %v404
      %772 = vrot.lane.b32.xlu0 %v771, 17
      %v773 = vpop.permute.xlu0 %772
      %775 = vrot.lane.b32.xlu0 %v404, 17
      %v776 = vpop.permute.xlu0 %775
      %vm777 = vcmask 138240
      %v778 = vsel %vm777, %v776, %v773
      %v781 = vsel %vm777, %v773, %v776
      %v782 = vlaneseq
      %v783 = vshrl.u32 %v782, 7
      %v784 = vsub.s32 0, %v783
      %v785 = vrot.slane %v406, %v784
      %v786 = vlaneseq
      %v787 = vshrl.u32 %v786, 7
      %v788 = vsub.s32 0, %v787
      %v789 = vrot.slane %v407, %v788
      %v790 = vmul.f32 %v781, %v785
      %v791 = vmul.f32 %v778, %v789
      %793 = vset.pattern.permute.xlu0 0
      %794 = vperm.xlu0 %793, %v768
      %v795 = vpop.permute.xlu0 %794
      %v797 = vmul.f32 %v790, %v795
      %v798 = vmul.f32 %v791, %v795
      %v799 = vadd.f32 %v797, 0.0
      %v800 = vadd.f32 %v798, 0.0
      %801 = vrot.lane.b32.xlu0 %v771, 16
      %v802 = vpop.permute.xlu0 %801
      %804 = vrot.lane.b32.xlu0 %v404, 16
      %v805 = vpop.permute.xlu0 %804
      %vm806 = vcmask 130048
      %v807 = vsel %vm806, %v805, %v802
      %v810 = vsel %vm806, %v802, %v805
      %v811 = vlaneseq
      %v812 = vshrl.u32 %v811, 7
      %v813 = vsub.s32 1, %v812
      %v814 = vrot.slane %v406, %v813
      %v815 = vlaneseq
      %v816 = vshrl.u32 %v815, 7
      %v817 = vsub.s32 1, %v816
      %v818 = vrot.slane %v407, %v817
      %v819 = vmul.f32 %v810, %v814
      %v820 = vmul.f32 %v807, %v818
      %821 = vset.pattern.permute.xlu0 1
      %822 = vperm.xlu0 %821, %v768
      %v823 = vpop.permute.xlu0 %822
      %v825 = vmul.f32 %v819, %v823
      %v826 = vmul.f32 %v820, %v823
      %v827 = vadd.f32 %v799, %v825
      %v828 = vadd.f32 %v800, %v826
      %829 = vrot.lane.b32.xlu0 %v771, 15
      %v830 = vpop.permute.xlu0 %829
      %832 = vrot.lane.b32.xlu0 %v404, 15
      %v833 = vpop.permute.xlu0 %832
      %vm834 = vcmask 121856
      %v835 = vsel %vm834, %v833, %v830
      %v838 = vsel %vm834, %v830, %v833
      %v839 = vlaneseq
      %v840 = vshrl.u32 %v839, 7
      %v841 = vsub.s32 2, %v840
      %v842 = vrot.slane %v406, %v841
      %v843 = vlaneseq
      %v844 = vshrl.u32 %v843, 7
      %v845 = vsub.s32 2, %v844
      %v846 = vrot.slane %v407, %v845
      %v847 = vmul.f32 %v838, %v842
      %v848 = vmul.f32 %v835, %v846
      %849 = vset.pattern.permute.xlu0 2
      %850 = vperm.xlu0 %849, %v768
      %v851 = vpop.permute.xlu0 %850
      %v853 = vmul.f32 %v847, %v851
      %v854 = vmul.f32 %v848, %v851
      %v855 = vadd.f32 %v827, %v853
      %v856 = vadd.f32 %v828, %v854
      %857 = vrot.lane.b32.xlu0 %v771, 14
      %v858 = vpop.permute.xlu0 %857
      %860 = vrot.lane.b32.xlu0 %v404, 14
      %v861 = vpop.permute.xlu0 %860
      %vm862 = vcmask 113664
      %v863 = vsel %vm862, %v861, %v858
      %v866 = vsel %vm862, %v858, %v861
      %v867 = vlaneseq
      %v868 = vshrl.u32 %v867, 7
      %v869 = vsub.s32 3, %v868
      %v870 = vrot.slane %v406, %v869
      %v871 = vlaneseq
      %v872 = vshrl.u32 %v871, 7
      %v873 = vsub.s32 3, %v872
      %v874 = vrot.slane %v407, %v873
      %v875 = vmul.f32 %v866, %v870
      %v876 = vmul.f32 %v863, %v874
      %877 = vset.pattern.permute.xlu0 3
      %878 = vperm.xlu0 %877, %v768
      %v879 = vpop.permute.xlu0 %878
      %v881 = vmul.f32 %v875, %v879
      %v882 = vmul.f32 %v876, %v879
      %v883 = vadd.f32 %v855, %v881
      %v884 = vadd.f32 %v856, %v882
      %885 = vrot.lane.b32.xlu0 %v771, 1
      %v886 = vpop.permute.xlu0 %885
      %888 = vrot.lane.b32.xlu0 %v404, 1
      %v889 = vpop.permute.xlu0 %888
      %v890 = vsel %vm498, %v889, %v886
      %v893 = vsel %vm498, %v886, %v889
      %v894 = vlaneseq
      %v895 = vshrl.u32 %v894, 7
      %v896 = vsub.s32 4, %v895
      %v897 = vrot.slane %v406, %v896
      %v898 = vlaneseq
      %v899 = vshrl.u32 %v898, 7
      %v900 = vsub.s32 4, %v899
      %v901 = vrot.slane %v407, %v900
      %v902 = vmul.f32 %v893, %v897
      %v903 = vmul.f32 %v890, %v901
      %904 = vset.pattern.permute.xlu0 4
      %905 = vperm.xlu0 %904, %v768
      %v906 = vpop.permute.xlu0 %905
      %v908 = vmul.f32 %v902, %v906
      %v909 = vmul.f32 %v903, %v906
      %v910 = vadd.f32 %v883, %v908
      %v911 = vadd.f32 %v884, %v909
      %v912 = vlaneseq
      %v913 = vshrl.u32 %v912, 7
      %v914 = vsub.s32 5, %v913
      %v915 = vrot.slane %v406, %v914
      %v916 = vlaneseq
      %v917 = vshrl.u32 %v916, 7
      %v918 = vsub.s32 5, %v917
      %v919 = vrot.slane %v407, %v918
      %v922 = vcombine.low %v915, %v919
      %v924 = vmul.f32 %v404, %v922
      %925 = vset.pattern.permute.xlu0 5
      %926 = vperm.xlu0 %925, %v768
      %v927 = vpop.permute.xlu0 %926
      %v929 = vunpack.c.l.s4 839922192
      %v930 = vunpack.c.0.s8 %v929
      %v931 = vlaneseq
      %v932 = vshrl.u32 %v931, 7
      %v933 = vsub.s32 %v930, %v932
      %v934 = vrot.slane %v927, %v933
      %v936 = vmul.f32 %v924, %v934
      %v938 = vcombine.high %v936, %v936
      %v940 = vadd.f32 %v910, %v936
      %v941 = vadd.f32 %v911, %v938
      %942 = vrot.lane.b32.xlu0 %v404, 127
      %v943 = vpop.permute.xlu0 %942
      %944 = vrot.lane.b32.xlu0 %v771, 127
      %v945 = vpop.permute.xlu0 %944
      %vm946 = vcmask 1039360
      %v947 = vsel %vm946, %v943, %v945
      %v951 = vsel %vm946, %v945, %v943
      %v952 = vlaneseq
      %v953 = vshrl.u32 %v952, 7
      %v954 = vsub.s32 6, %v953
      %v955 = vrot.slane %v406, %v954
      %v956 = vlaneseq
      %v957 = vshrl.u32 %v956, 7
      %v958 = vsub.s32 6, %v957
      %v959 = vrot.slane %v407, %v958
      %v960 = vmul.f32 %v947, %v955
      %v961 = vmul.f32 %v951, %v959
      %962 = vset.pattern.permute.xlu0 6
      %963 = vperm.xlu0 %962, %v768
      %v964 = vpop.permute.xlu0 %963
      %v966 = vmul.f32 %v960, %v964
      %v967 = vmul.f32 %v961, %v964
      %v968 = vadd.f32 %v940, %v966
      %v969 = vadd.f32 %v941, %v967
      %970 = vrot.lane.b32.xlu0 %v404, 126
      %v971 = vpop.permute.xlu0 %970
      %972 = vrot.lane.b32.xlu0 %v771, 126
      %v973 = vpop.permute.xlu0 %972
      %vm974 = vcmask 1031168
      %v975 = vsel %vm974, %v971, %v973
      %v979 = vsel %vm974, %v973, %v971
      %v980 = vlaneseq
      %v981 = vshrl.u32 %v980, 7
      %v982 = vsub.s32 7, %v981
      %v983 = vrot.slane %v406, %v982
      %v984 = vlaneseq
      %v985 = vshrl.u32 %v984, 7
      %v986 = vsub.s32 7, %v985
      %v987 = vrot.slane %v407, %v986
      %v988 = vmul.f32 %v975, %v983
      %v989 = vmul.f32 %v979, %v987
      %990 = vset.pattern.permute.xlu0 7
      %991 = vperm.xlu0 %990, %v768
      %v992 = vpop.permute.xlu0 %991
      %v994 = vmul.f32 %v988, %v992
      %v995 = vmul.f32 %v989, %v992
      %v996 = vadd.f32 %v968, %v994
      %v997 = vadd.f32 %v969, %v995
      %998 = vrot.lane.b32.xlu0 %v404, 113
      %v999 = vpop.permute.xlu0 %998
      %1000 = vrot.lane.b32.xlu0 %v771, 113
      %v1001 = vpop.permute.xlu0 %1000
      %vm1002 = vcmask 924672
      %v1003 = vsel %vm1002, %v999, %v1001
      %v1007 = vsel %vm1002, %v1001, %v999
      %v1008 = vlaneseq
      %v1009 = vshrl.u32 %v1008, 7
      %v1010 = vsub.s32 0, %v1009
      %v1011 = vrot.slane %v408, %v1010
      %v1012 = vlaneseq
      %v1013 = vshrl.u32 %v1012, 7
      %v1014 = vsub.s32 0, %v1013
      %v1015 = vrot.slane %v409, %v1014
      %v1016 = vmul.f32 %v1003, %v1011
      %v1017 = vmul.f32 %v1007, %v1015
      %1018 = vset.pattern.permute.xlu0 8
      %1019 = vperm.xlu0 %1018, %v768
      %v1020 = vpop.permute.xlu0 %1019
      %v1022 = vmul.f32 %v1016, %v1020
      %v1023 = vmul.f32 %v1017, %v1020
      %v1024 = vadd.f32 %v996, %v1022
      %v1025 = vadd.f32 %v997, %v1023
      %1026 = vrot.lane.b32.xlu0 %v404, 112
      %v1027 = vpop.permute.xlu0 %1026
      %1028 = vrot.lane.b32.xlu0 %v771, 112
      %v1029 = vpop.permute.xlu0 %1028
      %vm1030 = vcmask 916480
      %v1031 = vsel %vm1030, %v1027, %v1029
      %v1035 = vsel %vm1030, %v1029, %v1027
      %v1036 = vlaneseq
      %v1037 = vshrl.u32 %v1036, 7
      %v1038 = vsub.s32 1, %v1037
      %v1039 = vrot.slane %v408, %v1038
      %v1040 = vlaneseq
      %v1041 = vshrl.u32 %v1040, 7
      %v1042 = vsub.s32 1, %v1041
      %v1043 = vrot.slane %v409, %v1042
      %v1044 = vmul.f32 %v1031, %v1039
      %v1045 = vmul.f32 %v1035, %v1043
      %1046 = vset.pattern.permute.xlu0 9
      %1047 = vperm.xlu0 %1046, %v768
      %v1048 = vpop.permute.xlu0 %1047
      %v1050 = vmul.f32 %v1044, %v1048
      %v1051 = vmul.f32 %v1045, %v1048
      %v1052 = vadd.f32 %v1024, %v1050
      %v1053 = vadd.f32 %v1025, %v1051
      %1054 = vrot.lane.b32.xlu0 %v404, 111
      %v1055 = vpop.permute.xlu0 %1054
      %1056 = vrot.lane.b32.xlu0 %v771, 111
      %v1057 = vpop.permute.xlu0 %1056
      %vm1058 = vcmask 908288
      %v1059 = vsel %vm1058, %v1055, %v1057
      %v1063 = vsel %vm1058, %v1057, %v1055
      %v1064 = vlaneseq
      %v1065 = vshrl.u32 %v1064, 7
      %v1066 = vsub.s32 2, %v1065
      %v1067 = vrot.slane %v408, %v1066
      %v1068 = vlaneseq
      %v1069 = vshrl.u32 %v1068, 7
      %v1070 = vsub.s32 2, %v1069
      %v1071 = vrot.slane %v409, %v1070
      %v1072 = vmul.f32 %v1059, %v1067
      %v1073 = vmul.f32 %v1063, %v1071
      %1074 = vset.pattern.permute.xlu0 10
      %1075 = vperm.xlu0 %1074, %v768
      %v1076 = vpop.permute.xlu0 %1075
      %v1078 = vmul.f32 %v1072, %v1076
      %v1079 = vmul.f32 %v1073, %v1076
      %v1080 = vadd.f32 %v1052, %v1078
      %v1081 = vadd.f32 %v1053, %v1079
      %1082 = vrot.lane.b32.xlu0 %v404, 110
      %v1083 = vpop.permute.xlu0 %1082
      %1084 = vrot.lane.b32.xlu0 %v771, 110
      %v1085 = vpop.permute.xlu0 %1084
      %vm1086 = vcmask 900096
      %v1087 = vsel %vm1086, %v1083, %v1085
      %v1091 = vsel %vm1086, %v1085, %v1083
      %v1092 = vlaneseq
      %v1093 = vshrl.u32 %v1092, 7
      %v1094 = vsub.s32 3, %v1093
      %v1095 = vrot.slane %v408, %v1094
      %v1096 = vlaneseq
      %v1097 = vshrl.u32 %v1096, 7
      %v1098 = vsub.s32 3, %v1097
      %v1099 = vrot.slane %v409, %v1098
      %v1100 = vmul.f32 %v1087, %v1095
      %v1101 = vmul.f32 %v1091, %v1099
      %1102 = vset.pattern.permute.xlu0 11
      %1103 = vperm.xlu0 %1102, %v768
      %v1104 = vpop.permute.xlu0 %1103
      %v1106 = vmul.f32 %v1100, %v1104
      %v1107 = vmul.f32 %v1101, %v1104
      %v1108 = vadd.f32 %v1080, %v1106
      %v1109 = vadd.f32 %v1081, %v1107
      %1110 = vrot.lane.b32.xlu0 %v404, 97
      %v1111 = vpop.permute.xlu0 %1110
      %1112 = vrot.lane.b32.xlu0 %v771, 97
      %v1113 = vpop.permute.xlu0 %1112
      %vm1114 = vcmask 793600
      %v1115 = vsel %vm1114, %v1111, %v1113
      %v1119 = vsel %vm1114, %v1113, %v1111
      %v1120 = vlaneseq
      %v1121 = vshrl.u32 %v1120, 7
      %v1122 = vsub.s32 4, %v1121
      %v1123 = vrot.slane %v408, %v1122
      %v1124 = vlaneseq
      %v1125 = vshrl.u32 %v1124, 7
      %v1126 = vsub.s32 4, %v1125
      %v1127 = vrot.slane %v409, %v1126
      %v1128 = vmul.f32 %v1115, %v1123
      %v1129 = vmul.f32 %v1119, %v1127
      %1130 = vset.pattern.permute.xlu0 12
      %1131 = vperm.xlu0 %1130, %v768
      %v1132 = vpop.permute.xlu0 %1131
      %v1134 = vmul.f32 %v1128, %v1132
      %v1135 = vmul.f32 %v1129, %v1132
      %v1136 = vadd.f32 %v1108, %v1134
      %v1137 = vadd.f32 %v1109, %v1135
      %1138 = vrot.lane.b32.xlu0 %v404, 96
      %v1139 = vpop.permute.xlu0 %1138
      %1140 = vrot.lane.b32.xlu0 %v771, 96
      %v1141 = vpop.permute.xlu0 %1140
      %vm1142 = vcmask 785408
      %v1143 = vsel %vm1142, %v1139, %v1141
      %v1147 = vsel %vm1142, %v1141, %v1139
      %v1148 = vlaneseq
      %v1149 = vshrl.u32 %v1148, 7
      %v1150 = vsub.s32 5, %v1149
      %v1151 = vrot.slane %v408, %v1150
      %v1152 = vlaneseq
      %v1153 = vshrl.u32 %v1152, 7
      %v1154 = vsub.s32 5, %v1153
      %v1155 = vrot.slane %v409, %v1154
      %v1156 = vmul.f32 %v1143, %v1151
      %v1157 = vmul.f32 %v1147, %v1155
      %1158 = vset.pattern.permute.xlu0 13
      %1159 = vperm.xlu0 %1158, %v768
      %v1160 = vpop.permute.xlu0 %1159
      %v1162 = vmul.f32 %v1156, %v1160
      %v1163 = vmul.f32 %v1157, %v1160
      %v1164 = vadd.f32 %v1136, %v1162
      %v1165 = vadd.f32 %v1137, %v1163
      %1166 = vrot.lane.b32.xlu0 %v404, 95
      %v1167 = vpop.permute.xlu0 %1166
      %1168 = vrot.lane.b32.xlu0 %v771, 95
      %v1169 = vpop.permute.xlu0 %1168
      %vm1170 = vcmask 777216
      %v1171 = vsel %vm1170, %v1167, %v1169
      %v1175 = vsel %vm1170, %v1169, %v1167
      %v1176 = vlaneseq
      %v1177 = vshrl.u32 %v1176, 7
      %v1178 = vsub.s32 6, %v1177
      %v1179 = vrot.slane %v408, %v1178
      %v1180 = vlaneseq
      %v1181 = vshrl.u32 %v1180, 7
      %v1182 = vsub.s32 6, %v1181
      %v1183 = vrot.slane %v409, %v1182
      %v1184 = vmul.f32 %v1171, %v1179
      %v1185 = vmul.f32 %v1175, %v1183
      %1186 = vset.pattern.permute.xlu0 14
      %1187 = vperm.xlu0 %1186, %v768
      %v1188 = vpop.permute.xlu0 %1187
      %v1190 = vmul.f32 %v1184, %v1188
      %v1191 = vmul.f32 %v1185, %v1188
      %v1192 = vadd.f32 %v1164, %v1190
      %v1193 = vadd.f32 %v1165, %v1191
      %1194 = vrot.lane.b32.xlu0 %v404, 94
      %v1195 = vpop.permute.xlu0 %1194
      %1196 = vrot.lane.b32.xlu0 %v771, 94
      %v1197 = vpop.permute.xlu0 %1196
      %vm1198 = vcmask 769024
      %v1199 = vsel %vm1198, %v1195, %v1197
      %v1203 = vsel %vm1198, %v1197, %v1195
      %v1204 = vlaneseq
      %v1205 = vshrl.u32 %v1204, 7
      %v1206 = vsub.s32 7, %v1205
      %v1207 = vrot.slane %v408, %v1206
      %v1208 = vlaneseq
      %v1209 = vshrl.u32 %v1208, 7
      %v1210 = vsub.s32 7, %v1209
      %v1211 = vrot.slane %v409, %v1210
      %v1212 = vmul.f32 %v1199, %v1207
      %v1213 = vmul.f32 %v1203, %v1211
      %1214 = vset.pattern.permute.xlu0 15
      %1215 = vperm.xlu0 %1214, %v768
      %v1216 = vpop.permute.xlu0 %1215
      %v1218 = vmul.f32 %v1212, %v1216
      %v1219 = vmul.f32 %v1213, %v1216
      %v1220 = vadd.f32 %v1192, %v1218
      %v1221 = vadd.f32 %v1193, %v1219
      %1223 = vset.pattern.permute.xlu0 0
      %1224 = vperm.xlu0 %1223, %v769
      %v1225 = vpop.permute.xlu0 %1224
      %v1227 = vadd.f32 %v1220, %v1225
      %v1228 = vadd.f32 %v1221, %v1225
      %vm1229 = vcmask 1043456
      %v1230 = vsel %vm1229, %v1227, 0.0
      %v1231 = vsel %vm1229, %v1228, 0.0
      %v1232 = vadd.f32 %v1230, %v1231
      %1233 = vadd.xlane.f32.xlu0 %v1232
      %v1234 = vpop.xlane.xlu0 %1233
      %v1235 = vrot.slane %v1234, 4
      %v1236 = vadd.f32 %v1234, %v1235
      %v1237 = vrot.slane %v1236, 2
      %v1238 = vadd.f32 %v1236, %v1237
      %v1239 = vrot.slane %v1238, 1
      %v1240 = vadd.f32 %v1238, %v1239
      %s1241 = vtos %v1240
      %s1242 = smul.f32 %s1241, 0.0009765625
      %v1243 = vmul.f32 %v1227, %v1227
      %v1244 = vmul.f32 %v1228, %v1228
      %v1245 = vsel %vm1229, %v1243, 0.0
      %v1246 = vsel %vm1229, %v1244, 0.0
      %v1247 = vadd.f32 %v1245, %v1246
      %1248 = vadd.xlane.f32.xlu0 %v1247
      %v1249 = vpop.xlane.xlu0 %1248
      %v1250 = vrot.slane %v1249, 4
      %v1251 = vadd.f32 %v1249, %v1250
      %v1252 = vrot.slane %v1251, 2
      %v1253 = vadd.f32 %v1251, %v1252
      %v1254 = vrot.slane %v1253, 1
      %v1255 = vadd.f32 %v1253, %v1254
      %s1256 = vtos %v1255
      %s1257 = smul.f32 %s1256, 0.0009765625
      %s1258 = smul.f32 %s1242, %s1242
      %s1259 = ssub.f32 %s1257, %s1258
      %s1260 = smax.f32 %s1259, 0.0
      %v1261 = vstv %s1242
      %v1262 = vsub.f32 %v1227, %v1261
      %v1263 = vsub.f32 %v1228, %v1261
      %s1264 = sadd.f32 %s1260, 1e-05
      %v1265 = vstv %s1264
      %v1266 = vrsqrt.pop %v1265
      %s1267 = vtos %v1266
      %v1268 = vstv %s1267
      %v1269 = vmul.f32 %v1262, %v1268
      %v1270 = vmul.f32 %v1263, %v1268
      %1271 = vset.pattern.permute.xlu0 1
      %1272 = vperm.xlu0 %1271, %v769
      %v1273 = vpop.permute.xlu0 %1272
      %v1275 = vmul.f32 %v1269, %v1273
      %v1276 = vmul.f32 %v1270, %v1273
      %1277 = vset.pattern.permute.xlu0 2
      %1278 = vperm.xlu0 %1277, %v769
      %v1279 = vpop.permute.xlu0 %1278
      %v1281 = vadd.f32 %v1275, %v1279
      %v1282 = vadd.f32 %v1276, %v1279
      %v1283 = vld [vmem:[%s8] sm:$0xf]
      %v1284 = vld [vmem:[%s9] sm:$0xf]
      %1286 = vset.pattern.permute.xlu0 0
      %1287 = vperm.xlu0 %1286, %v1283
      %v1288 = vpop.permute.xlu0 %1287
      %v1290 = vmul.f32 %v427, %v1288
      %v1291 = vadd.f32 %v1290, 0.0
      %1292 = vset.pattern.permute.xlu0 1
      %1293 = vperm.xlu0 %1292, %v1283
      %v1294 = vpop.permute.xlu0 %1293
      %v1296 = vmul.f32 %v447, %v1294
      %v1297 = vadd.f32 %v1291, %v1296
      %1298 = vset.pattern.permute.xlu0 2
      %1299 = vperm.xlu0 %1298, %v1283
      %v1300 = vpop.permute.xlu0 %1299
      %v1302 = vmul.f32 %v466, %v1300
      %v1303 = vadd.f32 %v1297, %v1302
      %1304 = vset.pattern.permute.xlu0 3
      %1305 = vperm.xlu0 %1304, %v1283
      %v1306 = vpop.permute.xlu0 %1305
      %v1308 = vmul.f32 %v485, %v1306
      %v1309 = vadd.f32 %v1303, %v1308
      %1310 = vset.pattern.permute.xlu0 4
      %1311 = vperm.xlu0 %1310, %v1283
      %v1312 = vpop.permute.xlu0 %1311
      %v1314 = vmul.f32 %v504, %v1312
      %v1315 = vadd.f32 %v1309, %v1314
      %1316 = vset.pattern.permute.xlu0 5
      %1317 = vperm.xlu0 %1316, %v1283
      %v1318 = vpop.permute.xlu0 %1317
      %v1320 = vmul.f32 %v515, %v1318
      %v1321 = vadd.f32 %v1315, %v1320
      %1322 = vset.pattern.permute.xlu0 6
      %1323 = vperm.xlu0 %1322, %v1283
      %v1324 = vpop.permute.xlu0 %1323
      %v1326 = vmul.f32 %v534, %v1324
      %v1327 = vadd.f32 %v1321, %v1326
      %1328 = vset.pattern.permute.xlu0 7
      %1329 = vperm.xlu0 %1328, %v1283
      %v1330 = vpop.permute.xlu0 %1329
      %v1332 = vmul.f32 %v553, %v1330
      %v1333 = vadd.f32 %v1327, %v1332
      %1334 = vset.pattern.permute.xlu0 8
      %1335 = vperm.xlu0 %1334, %v1283
      %v1336 = vpop.permute.xlu0 %1335
      %v1338 = vmul.f32 %v572, %v1336
      %v1339 = vadd.f32 %v1333, %v1338
      %1340 = vset.pattern.permute.xlu0 9
      %1341 = vperm.xlu0 %1340, %v1283
      %v1342 = vpop.permute.xlu0 %1341
      %v1344 = vmul.f32 %v591, %v1342
      %v1345 = vadd.f32 %v1339, %v1344
      %1346 = vset.pattern.permute.xlu0 10
      %1347 = vperm.xlu0 %1346, %v1283
      %v1348 = vpop.permute.xlu0 %1347
      %v1350 = vmul.f32 %v610, %v1348
      %v1351 = vadd.f32 %v1345, %v1350
      %1352 = vset.pattern.permute.xlu0 11
      %1353 = vperm.xlu0 %1352, %v1283
      %v1354 = vpop.permute.xlu0 %1353
      %v1356 = vmul.f32 %v629, %v1354
      %v1357 = vadd.f32 %v1351, %v1356
      %1358 = vset.pattern.permute.xlu0 12
      %1359 = vperm.xlu0 %1358, %v1283
      %v1360 = vpop.permute.xlu0 %1359
      %v1362 = vmul.f32 %v648, %v1360
      %v1363 = vadd.f32 %v1357, %v1362
      %1364 = vset.pattern.permute.xlu0 13
      %1365 = vperm.xlu0 %1364, %v1283
      %v1366 = vpop.permute.xlu0 %1365
      %v1368 = vmul.f32 %v667, %v1366
      %v1369 = vadd.f32 %v1363, %v1368
      %1370 = vset.pattern.permute.xlu0 14
      %1371 = vperm.xlu0 %1370, %v1283
      %v1372 = vpop.permute.xlu0 %1371
      %v1374 = vmul.f32 %v686, %v1372
      %v1375 = vadd.f32 %v1369, %v1374
      %1376 = vset.pattern.permute.xlu0 15
      %1377 = vperm.xlu0 %1376, %v1283
      %v1378 = vpop.permute.xlu0 %1377
      %v1380 = vmul.f32 %v705, %v1378
      %v1381 = vadd.f32 %v1375, %v1380
      %1383 = vset.pattern.permute.xlu0 0
      %1384 = vperm.xlu0 %1383, %v1284
      %v1385 = vpop.permute.xlu0 %1384
      %v1387 = vadd.f32 %v1381, %v1385
      %v1388 = vsel %vm718, %v1387, 0.0
      %1389 = vadd.xlane.f32.xlu0 %v1388
      %v1390 = vpop.xlane.xlu0 %1389
      %v1391 = vrot.slane %v1390, 4
      %v1392 = vadd.f32 %v1390, %v1391
      %v1393 = vrot.slane %v1392, 2
      %v1394 = vadd.f32 %v1392, %v1393
      %v1395 = vrot.slane %v1394, 1
      %v1396 = vadd.f32 %v1394, %v1395
      %s1397 = vtos %v1396
      %s1398 = smul.f32 %s1397, 0.00390625
      %v1399 = vmul.f32 %v1387, %v1387
      %v1400 = vsel %vm718, %v1399, 0.0
      %1401 = vadd.xlane.f32.xlu0 %v1400
      %v1402 = vpop.xlane.xlu0 %1401
      %v1403 = vrot.slane %v1402, 4
      %v1404 = vadd.f32 %v1402, %v1403
      %v1405 = vrot.slane %v1404, 2
      %v1406 = vadd.f32 %v1404, %v1405
      %v1407 = vrot.slane %v1406, 1
      %v1408 = vadd.f32 %v1406, %v1407
      %s1409 = vtos %v1408
      %s1410 = smul.f32 %s1409, 0.00390625
      %s1411 = smul.f32 %s1398, %s1398
      %s1412 = ssub.f32 %s1410, %s1411
      %s1413 = smax.f32 %s1412, 0.0
      %v1414 = vstv %s1398
      %v1415 = vsub.f32 %v1387, %v1414
      %s1416 = sadd.f32 %s1413, 1e-05
      %v1417 = vstv %s1416
      %v1418 = vrsqrt.pop %v1417
      %s1419 = vtos %v1418
      %v1420 = vstv %s1419
      %v1421 = vmul.f32 %v1415, %v1420
      %1422 = vset.pattern.permute.xlu0 1
      %1423 = vperm.xlu0 %1422, %v1284
      %v1424 = vpop.permute.xlu0 %1423
      %v1426 = vmul.f32 %v1421, %v1424
      %1427 = vset.pattern.permute.xlu0 2
      %1428 = vperm.xlu0 %1427, %v1284
      %v1429 = vpop.permute.xlu0 %1428
      %v1431 = vadd.f32 %v1426, %v1429
      %v1432 = vld [vmem:[%s10] sm:$0xff]
      %v1433 = vld [vmem:[%s10 + $0x8] sm:$0xff]
      %v1434 = vld [vmem:[%s10 + $0x10] sm:$0xff]
      %v1435 = vld [vmem:[%s10 + $0x18] sm:$0xff]
      %v1436 = vld [vmem:[%s10 + $0x20] sm:$0xff]
      %v1437 = vld [vmem:[%s10 + $0x28] sm:$0xff]
      %v1438 = vld [vmem:[%s10 + $0x30] sm:$0xff]
      %v1439 = vld [vmem:[%s10 + $0x38] sm:$0xff]
      %v1440 = vld [vmem:[%s10 + $0x40] sm:$0xff]
      %v1441 = vld [vmem:[%s10 + $0x48] sm:$0xff]
      %v1442 = vld [vmem:[%s10 + $0x50] sm:$0xff]
      %v1443 = vld [vmem:[%s10 + $0x58] sm:$0xff]
      %v1444 = vld [vmem:[%s10 + $0x60] sm:$0xff]
      %v1445 = vld [vmem:[%s10 + $0x68] sm:$0xff]
      %v1446 = vld [vmem:[%s10 + $0x70] sm:$0xff]
      %v1447 = vld [vmem:[%s10 + $0x78] sm:$0xff]
      %vm1448 = vcmask 523264
      %v1450 = vsel %vm1448, %v767, 0
      %1452 = vmatprep.subr.mxu0 %v1433
      %1453 = vmatpush1.msra.mxu0 %v1432
      %1454 = vmatprep.subr.mxu0 %v1435
      %1455 = vmatpush1.msra.mxu0 %v1434
      %1456 = vmatprep.subr.mxu0 %v1437
      %1457 = vmatpush1.msra.mxu0 %v1436
      %1458 = vmatprep.subr.mxu0 %v1439
      %1459 = vmatpush1.msra.mxu0 %v1438
      %1460 = vmatprep.subr.mxu0 %v1441
      %1461 = vmatpush1.msra.mxu0 %v1440
      %1462 = vmatprep.subr.mxu0 %v1443
      %1463 = vmatpush1.msra.mxu0 %v1442
      %1464 = vmatprep.subr.mxu0 %v1445
      %1465 = vmatpush1.msra.mxu0 %v1444
      %1466 = vmatprep.subr.mxu0 %v1447
      %1467 = vmatpush1.msra.mxu0 %v1446
      %1468 = vmatprep.subr.mxu0 0.0
      %1469 = vmatpush1.msra.mxu0 0.0
      %1470 = vmatprep.subr.mxu0 0.0
      %1471 = vmatpush1.msra.mxu0 0.0
      %1472 = vmatprep.subr.mxu0 0.0
      %1473 = vmatpush1.msra.mxu0 0.0
      %1474 = vmatprep.subr.mxu0 0.0
      %1475 = vmatpush1.msra.mxu0 0.0
      %1476 = vmatprep.subr.mxu0 0.0
      %1477 = vmatpush1.msra.mxu0 0.0
      %1478 = vmatprep.subr.mxu0 0.0
      %1479 = vmatpush1.msra.mxu0 0.0
      %1480 = vmatprep.subr.mxu0 0.0
      %1481 = vmatpush1.msra.mxu0 0.0
      %1482 = vmatprep.subr.mxu0 0.0
      %1483 = vmatpush1.msra.mxu0 0.0
      %1484 = vmatprep.subr.mxu0 0.0
      %1485 = vmatpush1.msra.mxu0 0.0
      %1486 = vmatprep.subr.mxu0 0.0
      %1487 = vmatpush1.msra.mxu0 0.0
      %1488 = vmatprep.subr.mxu0 0.0
      %1489 = vmatpush1.msra.mxu0 0.0
      %1490 = vmatprep.subr.mxu0 0.0
      %1491 = vmatpush1.msra.mxu0 0.0
      %1492 = vmatprep.subr.mxu0 0.0
      %1493 = vmatpush1.msra.mxu0 0.0
      %1494 = vmatprep.subr.mxu0 0.0
      %1495 = vmatpush1.msra.mxu0 0.0
      %1496 = vmatprep.subr.mxu0 0.0
      %1497 = vmatpush1.msra.mxu0 0.0
      %1498 = vmatprep.subr.mxu0 0.0
      %1499 = vmatpush1.msra.mxu0 0.0
      %1500 = vmatprep.subr.mxu0 0.0
      %1501 = vmatpush1.msra.mxu0 0.0
      %1502 = vmatprep.subr.mxu0 0.0
      %1503 = vmatpush1.msra.mxu0 0.0
      %1504 = vmatprep.subr.mxu0 0.0
      %1505 = vmatpush1.msra.mxu0 0.0
      %1506 = vmatprep.subr.mxu0 0.0
      %1507 = vmatpush1.msra.mxu0 0.0
      %1508 = vmatprep.subr.mxu0 0.0
      %1509 = vmatpush1.msra.mxu0 0.0
      %1510 = vmatprep.subr.mxu0 0.0
      %1511 = vmatpush1.msra.mxu0 0.0
      %1512 = vmatprep.subr.mxu0 0.0
      %1513 = vmatpush1.msra.mxu0 0.0
      %1514 = vmatprep.subr.mxu0 0.0
      %1515 = vmatpush1.msra.mxu0 0.0
      %1516 = vmatprep.mubr.f32.mxu0 0.0
      %1517 = vmatmul.mubr.f32.gmra.mrb[0].mxu0 %v1450
      %v1518 = vpop.f32.mrb[0].mxu0
      %v1519 = vadd.f32 0.0, %v1518
      %v1520 = vpop.f32.mrb[0].mxu0
      %v1521 = vadd.f32 0.0, %v1520
      %1522 = vdwg.mxu0
      %v1524 = vsel %vm1448, %v1431, 0
      %1526 = vmatprep.subr.mxu0 %v1433
      %1527 = vmatpush1.msra.mxu0 %v1432
      %1528 = vmatprep.subr.mxu0 %v1435
      %1529 = vmatpush1.msra.mxu0 %v1434
      %1530 = vmatprep.subr.mxu0 %v1437
      %1531 = vmatpush1.msra.mxu0 %v1436
      %1532 = vmatprep.subr.mxu0 %v1439
      %1533 = vmatpush1.msra.mxu0 %v1438
      %1534 = vmatprep.subr.mxu0 %v1441
      %1535 = vmatpush1.msra.mxu0 %v1440
      %1536 = vmatprep.subr.mxu0 %v1443
      %1537 = vmatpush1.msra.mxu0 %v1442
      %1538 = vmatprep.subr.mxu0 %v1445
      %1539 = vmatpush1.msra.mxu0 %v1444
      %1540 = vmatprep.subr.mxu0 %v1447
      %1541 = vmatpush1.msra.mxu0 %v1446
      %1542 = vmatprep.subr.mxu0 0.0
      %1543 = vmatpush1.msra.mxu0 0.0
      %1544 = vmatprep.subr.mxu0 0.0
      %1545 = vmatpush1.msra.mxu0 0.0
      %1546 = vmatprep.subr.mxu0 0.0
      %1547 = vmatpush1.msra.mxu0 0.0
      %1548 = vmatprep.subr.mxu0 0.0
      %1549 = vmatpush1.msra.mxu0 0.0
      %1550 = vmatprep.subr.mxu0 0.0
      %1551 = vmatpush1.msra.mxu0 0.0
      %1552 = vmatprep.subr.mxu0 0.0
      %1553 = vmatpush1.msra.mxu0 0.0
      %1554 = vmatprep.subr.mxu0 0.0
      %1555 = vmatpush1.msra.mxu0 0.0
      %1556 = vmatprep.subr.mxu0 0.0
      %1557 = vmatpush1.msra.mxu0 0.0
      %1558 = vmatprep.subr.mxu0 0.0
      %1559 = vmatpush1.msra.mxu0 0.0
      %1560 = vmatprep.subr.mxu0 0.0
      %1561 = vmatpush1.msra.mxu0 0.0
      %1562 = vmatprep.subr.mxu0 0.0
      %1563 = vmatpush1.msra.mxu0 0.0
      %1564 = vmatprep.subr.mxu0 0.0
      %1565 = vmatpush1.msra.mxu0 0.0
      %1566 = vmatprep.subr.mxu0 0.0
      %1567 = vmatpush1.msra.mxu0 0.0
      %1568 = vmatprep.subr.mxu0 0.0
      %1569 = vmatpush1.msra.mxu0 0.0
      %1570 = vmatprep.subr.mxu0 0.0
      %1571 = vmatpush1.msra.mxu0 0.0
      %1572 = vmatprep.subr.mxu0 0.0
      %1573 = vmatpush1.msra.mxu0 0.0
      %1574 = vmatprep.subr.mxu0 0.0
      %1575 = vmatpush1.msra.mxu0 0.0
      %1576 = vmatprep.subr.mxu0 0.0
      %1577 = vmatpush1.msra.mxu0 0.0
      %1578 = vmatprep.subr.mxu0 0.0
      %1579 = vmatpush1.msra.mxu0 0.0
      %1580 = vmatprep.subr.mxu0 0.0
      %1581 = vmatpush1.msra.mxu0 0.0
      %1582 = vmatprep.subr.mxu0 0.0
      %1583 = vmatpush1.msra.mxu0 0.0
      %1584 = vmatprep.subr.mxu0 0.0
      %1585 = vmatpush1.msra.mxu0 0.0
      %1586 = vmatprep.subr.mxu0 0.0
      %1587 = vmatpush1.msra.mxu0 0.0
      %1588 = vmatprep.subr.mxu0 0.0
      %1589 = vmatpush1.msra.mxu0 0.0
      %1590 = vmatprep.mubr.f32.mxu0 0.0
      %1591 = vmatmul.mubr.f32.gmra.mrb[0].mxu0 %v1524
      %v1592 = vpop.f32.mrb[0].mxu0
      %v1593 = vadd.f32 0.0, %v1592
      %v1594 = vpop.f32.mrb[0].mxu0
      %v1595 = vadd.f32 0.0, %v1594
      %1596 = vdwg.mxu0
      %v1597 = vmul.f32 %v1519, %v1281
      %v1598 = vmul.f32 %v1521, %v1282
      %v1599 = vadd.f32 %v1597, %v1593
      %v1600 = vadd.f32 %v1598, %v1595
      %v1603 = vcombine.low %v1599, %v1600
      %1605 = vst [vmem:[%s403] sm:$0xff] %v1603
      %p1606 = scmp.lt.s32.totalorder %s22, 1
      %s1607 = scalar_select %p1606, %s22, 1
      %s1608 = smul.addr %s1607, 2
      %s1609 = smul.addr %s1608, 4
      %s1610 = scalar_lea.vmem %s11, %s1609
      // Predicated region
      $region65: #{tfar_forward.1} parent=63 // pred_check
        %p1611 = pneg %p281
      $region66: #{tfar_forward.1} parent=63 // pred_check_branch
        %1613 = sbr.rel (%p1611) target = $region68
      $region67: #{tfar_forward.1} parent=63 // pred_region
        _
      $region68: #{tfar_forward.1} parent=63 // pred_fallthru
        _
    $region64: #{tfar_forward.1} parent=5 // pred_fallthru
      _
    %p1614 = scmp.le.s32.totalorder 2, %s17
    // Predicated region
    $region69: #{tfar_forward.1} parent=5 // pred_check
      %p1615 = pneg %p1614
    $region70: #{tfar_forward.1} parent=5 // pred_check_branch
      %1617 = sbr.rel (%p1615) target = $region72
    $region71: #{tfar_forward.1} parent=5 // pred_region
      %s1618 = ssub.s32 %s17, 2
      // Predicated region
      $region73: #{tfar_forward.1} parent=71 // pred_check
        %p1619 = pneg %p287
      $region74: #{tfar_forward.1} parent=71 // pred_check_branch
        %1621 = sbr.rel (%p1619) target = $region76
      $region75: #{tfar_forward.1} parent=71 // pred_region
        %p1622 = scmp.lt.s32.totalorder %s23, 1
        %s1623 = scalar_select %p1622, %s23, 1
        %s1624 = smul.addr %s1623, 2
        %s1625 = smul.addr %s1624, 4
        %s1626 = scalar_lea.vmem %s11, %s1625
      $region76: #{tfar_forward.1} parent=71 // pred_fallthru
        _
    $region72: #{tfar_forward.1} parent=5 // pred_fallthru
      _
  $region6: #{tfar_forward.1} parent=0 // loop_footer
    %s21 = sadd.s32 1, %s17
  $region7: #{tfar_forward.1} parent=0 // loop_footer_branch
    %16 = sbr.rel target = $region3
  $region8: #{tfar_forward.1} parent=0 // loop_exit
    _

</llo_original>
